<compile_context>
chip_gen: v5e
topology: v5e:2x2
jax: 0.10.0
libtpu: 0.0.40
codegen_flags: <defaults>
</compile_context>

<pallas_src>
import math
import functools

import jax
import jax.numpy as jnp
from jax.experimental import pallas as pl
from jax.experimental.pallas import tpu as pltpu


ORDER_KQSAME = ['wk', 'bk', 'wv', 'bv', 'wo', 'bo',
                'ln1g', 'ln1b', 'w1', 'b1', 'w2', 'b2', 'ln2g', 'ln2b']
ORDER_FULL = ['wqk', 'bqk'] + ORDER_KQSAME[2:]


# ----------------------------------------------------------------------------
# Single-invocation kernel: in-kernel loop over blocks, x carried in vregs.
# ----------------------------------------------------------------------------
def arch_kernel(x_ref, y_ref, bias_ref, zp_ref, *rest,
                n_blocks, B, S, H, dk, kq_same, mm_dtype):
    if kq_same:
        (wk_ref, bk_ref, wv_ref, bv_ref, wo_ref, bo_ref,
         g1_ref, be1_ref, w1_ref, b1_ref, w2_ref, b2_ref,
         g2_ref, be2_ref, out_ref) = rest
        wqk_ref = bqk_ref = None
    else:
        (wqk_ref, bqk_ref, wv_ref, bv_ref, wo_ref, bo_ref,
         g1_ref, be1_ref, w1_ref, b1_ref, w2_ref, b2_ref,
         g2_ref, be2_ref, out_ref) = rest

    D = H * dk
    BS = B * S
    scale = 1.0 / math.sqrt(dk)

    x0 = x_ref[...]          # [BS, D] query/key stream (carried across blocks)
    y = y_ref[...]           # [BS, D] value stream (constant across blocks)
    bias = bias_ref[...]     # [S, S]  additive strict-causal mask (0 / -1e32)
    zp = zp_ref[...]         # [S, 1]  zero-pad multiplier (0 for row 0, else 1)

    def mm(a, b):            # full-width MXU matmul, f32 accumulation
        return jnp.dot(a.astype(mm_dtype), b.astype(mm_dtype),
                       preferred_element_type=jnp.float32)

    def bmm(eq, a, b):       # batched matmul (leading batch dim = B*H)
        return jnp.einsum(eq, a.astype(mm_dtype), b.astype(mm_dtype),
                          preferred_element_type=jnp.float32)

    def to_heads(t):         # [BS, D] -> [B*H, S, dk]
        return (t.reshape(B, S, H, dk)
                 .transpose(0, 2, 1, 3)
                 .reshape(B * H, S, dk))

    def layer_norm(z, g, b, eps=1e-5):
        mu = jnp.mean(z, axis=-1, keepdims=True)
        var = jnp.mean(jnp.square(z - mu), axis=-1, keepdims=True)
        return (z - mu) * jax.lax.rsqrt(var + eps) * g + b

    def block_step(blk, x):
        # --- projections: full-width matmuls (heads formed only below) ------
        if kq_same:
            k2 = mm(x, wk_ref[blk]) + bk_ref[blk]          # [BS, D]
            q2 = k2                                        # q_linear == k_linear
        else:
            qk2 = mm(x, wqk_ref[blk]) + bqk_ref[blk]       # [BS, 2D] fused Q|K
            q2 = qk2[:, :D]
            k2 = qk2[:, D:]
        v2 = mm(y, wv_ref[blk]) + bv_ref[blk]              # [BS, D]

        qh = to_heads(q2)                                  # [B*H, S, dk]
        kh = to_heads(k2)
        vh = to_heads(v2)

        # --- per-(batch, head) attention, softmax/masking in f32 ------------
        s = bmm('zid,zjd->zij', qh, kh) * scale            # [B*H, S, S]
        s = s + bias[None]                                 # strict-causal mask
        m = jnp.max(s, axis=-1, keepdims=True)
        e = jnp.exp(s - m)
        denom = jnp.sum(e, axis=-1, keepdims=True)
        p = e * pl.reciprocal(denom, approx=True)
        p = p * zp[None]                                   # zero_pad row 0

        ho = bmm('zij,zjd->zid', p, vh)                    # [B*H, S, dk]
        concat = (ho.reshape(B, H, S, dk)
                    .transpose(0, 2, 1, 3)
                    .reshape(BS, D))                       # head-major concat

        attn = mm(concat, wo_ref[blk]) + bo_ref[blk]       # [BS, D]

        # --- residual + LN, FFN, residual + LN ------------------------------
        h1 = layer_norm(x + attn, g1_ref[blk], be1_ref[blk])
        ff = jnp.maximum(mm(h1, w1_ref[blk]) + b1_ref[blk], 0.0)
        ff = mm(ff, w2_ref[blk]) + b2_ref[blk]
        return layer_norm(h1 + ff, g2_ref[blk], be2_ref[blk])

    out_ref[...] = jax.lax.fori_loop(0, n_blocks, block_step, x0)


def fused_forward(x2d, y2d, bias, zp, w_args, *, n_blocks, B, S, H, dk,
                  kq_same, mm_dtype):
    BS, D = x2d.shape
    kern = functools.partial(arch_kernel, n_blocks=n_blocks, B=B, S=S, H=H,
                             dk=dk, kq_same=kq_same, mm_dtype=mm_dtype)
    return pl.pallas_call(
        kern,
        out_shape=jax.ShapeDtypeStruct((BS, D), jnp.float32),
        compiler_params=pltpu.CompilerParams(
            vmem_limit_bytes=64 * 1024 * 1024),
    )(x2d, y2d, bias, zp, *w_args)


# ----------------------------------------------------------------------------
# Glue (plain JAX): positional embedding, param construction & packing
# ----------------------------------------------------------------------------
def cosine_positional_embedding(max_len, d_model):
    # With even d_model the 0.1*randn init is fully overwritten -> deterministic.
    position = jnp.arange(max_len, dtype=jnp.float32)[:, None]
    div_term = jnp.exp(jnp.arange(0, d_model, 2, dtype=jnp.float32)
                       * (-(math.log(10000.0) / d_model)))
    pe = jnp.zeros((max_len, d_model), jnp.float32)
    pe = pe.at[:, 0::2].set(jnp.sin(position * div_term))
    pe = pe.at[:, 1::2].set(jnp.cos(position * div_term))
    return pe


def xavier_uniform(key, fan_in, fan_out):
    a = math.sqrt(6.0 / (fan_in + fan_out))
    return jax.random.uniform(key, (fan_in, fan_out), jnp.float32, -a, a)


def init_block_params(key, d_model, d_ff, kq_same):
    ks = jax.random.split(key, 8)
    wk = xavier_uniform(ks[0], d_model, d_model)
    wv = xavier_uniform(ks[1], d_model, d_model)
    wq = wk if kq_same else xavier_uniform(ks[2], d_model, d_model)
    wo = xavier_uniform(ks[3], d_model, d_model)
    bk = jnp.zeros((1, d_model), jnp.float32)
    bv = jnp.zeros((1, d_model), jnp.float32)
    bq = bk if kq_same else jnp.zeros((1, d_model), jnp.float32)
    bo = jnp.zeros((1, d_model), jnp.float32)
    lim1 = 1.0 / math.sqrt(d_model)
    lim2 = 1.0 / math.sqrt(d_ff)
    w1 = jax.random.uniform(ks[4], (d_model, d_ff), jnp.float32, -lim1, lim1)
    b1 = jax.random.uniform(ks[5], (1, d_ff), jnp.float32, -lim1, lim1)
    w2 = jax.random.uniform(ks[6], (d_ff, d_model), jnp.float32, -lim2, lim2)
    b2 = jax.random.uniform(ks[7], (1, d_model), jnp.float32, -lim2, lim2)
    return dict(wq=wq, bq=bq, wk=wk, bk=bk, wv=wv, bv=bv, wo=wo, bo=bo,
                ln1g=jnp.ones((1, d_model), jnp.float32),
                ln1b=jnp.zeros((1, d_model), jnp.float32),
                w1=w1, b1=b1, w2=w2, b2=b2,
                ln2g=jnp.ones((1, d_model), jnp.float32),
                ln2b=jnp.zeros((1, d_model), jnp.float32))


def stack_block_params(block_params, *, kq_same):
    """Stack per-block params along a leading block axis (no per-head split)."""
    out = {}

    def stk(name, arrs=None):
        out[name] = jnp.stack(
            arrs if arrs is not None else [p[name] for p in block_params], axis=0)

    if kq_same:
        stk('wk'); stk('bk')
    else:
        # Q and K both project the same input (query == key) -> fuse to [D, 2D].
        stk('wqk', [jnp.concatenate([p['wq'], p['wk']], axis=1)
                    for p in block_params])
        stk('bqk', [jnp.concatenate([p['bq'], p['bk']], axis=1)
                    for p in block_params])
    for n in ('wv', 'bv', 'wo', 'bo', 'ln1g', 'ln1b',
              'w1', 'b1', 'w2', 'b2', 'ln2g', 'ln2b'):
        stk(n)
    return out


def architecture_forward(q_embed_data, qa_embed_data, block_params, pe,
                         *, n_heads, kq_same=True, mm_dtype=jnp.float32):
    B, S, D = q_embed_data.shape
    dk = D // n_heads
    posemb = pe[:S][None, :, :]
    x2d = (q_embed_data + posemb).reshape(B * S, D).astype(jnp.float32)  # q_pos_embed
    y2d = (qa_embed_data + posemb).reshape(B * S, D).astype(jnp.float32) # qa_pos_embed

    # Hoisted masks (computed once, passed resident to the kernel).
    i = jnp.arange(S, dtype=jnp.int32)[:, None]
    j = jnp.arange(S, dtype=jnp.int32)[None, :]
    bias = jnp.where(j < i, 0.0, -1e32).astype(jnp.float32)   # strict causal
    zp = (i > 0).astype(jnp.float32)                          # zero_pad row 0

    stacked = stack_block_params(block_params, kq_same=kq_same)
    names = ORDER_KQSAME if kq_same else ORDER_FULL
    w_args = [stacked[n] for n in names]
    n_blocks = w_args[0].shape[0]

    out2d = fused_forward(x2d, y2d, bias, zp, w_args, n_blocks=n_blocks,
                          B=B, S=S, H=n_heads, dk=dk, kq_same=kq_same,
                          mm_dtype=mm_dtype)
    return out2d.reshape(B, S, D)


if __name__ == "__main__":
    # Small, module-consistent shapes
    batch, seq_len, d_model, n_heads, d_ff, n_blocks = 2, 8, 32, 2, 64, 2
    kq_same = True          # kq_same = 1
    # dropout = 0.0 -> identity (eval semantics)

    key = jax.random.PRNGKey(0)
    k_q, k_qa, k_p = jax.random.split(key, 3)
    q_embed_data = jax.random.normal(k_q, (batch, seq_len, d_model), jnp.float32)
    qa_embed_data = jax.random.normal(k_qa, (batch, seq_len, d_model), jnp.float32)

    pe = cosine_positional_embedding(seq_len, d_model)
    block_params = [init_block_params(k, d_model, d_ff, kq_same)
                    for k in jax.random.split(k_p, n_blocks)]

    # mm_dtype=jnp.float32 preserves exact module numerics at these sizes;
    # use jnp.bfloat16 on v6e/v7x once shapes are MXU-bound.
    out = architecture_forward(q_embed_data, qa_embed_data, block_params, pe,
                               n_heads=n_heads, kq_same=kq_same,
                               mm_dtype=jnp.float32)
    jax.block_until_ready(out)
    assert out.shape == (batch, seq_len, d_model)
    print("KERNEL_OK")
</pallas_src>

<mosaic_0001>
module attributes {stable_mosaic.version = 11 : i64} {
  func.func @arch_kernel(%arg0: memref<16x32xf32, #tpu.memory_space<vmem>>, %arg1: memref<16x32xf32, #tpu.memory_space<vmem>>, %arg2: memref<8x8xf32, #tpu.memory_space<vmem>>, %arg3: memref<8x1xf32, #tpu.memory_space<vmem>>, %arg4: memref<2x32x32xf32, #tpu.memory_space<vmem>>, %arg5: memref<2x1x32xf32, #tpu.memory_space<vmem>>, %arg6: memref<2x32x32xf32, #tpu.memory_space<vmem>>, %arg7: memref<2x1x32xf32, #tpu.memory_space<vmem>>, %arg8: memref<2x32x32xf32, #tpu.memory_space<vmem>>, %arg9: memref<2x1x32xf32, #tpu.memory_space<vmem>>, %arg10: memref<2x1x32xf32, #tpu.memory_space<vmem>>, %arg11: memref<2x1x32xf32, #tpu.memory_space<vmem>>, %arg12: memref<2x32x64xf32, #tpu.memory_space<vmem>>, %arg13: memref<2x1x64xf32, #tpu.memory_space<vmem>>, %arg14: memref<2x64x32xf32, #tpu.memory_space<vmem>>, %arg15: memref<2x1x32xf32, #tpu.memory_space<vmem>>, %arg16: memref<2x1x32xf32, #tpu.memory_space<vmem>>, %arg17: memref<2x1x32xf32, #tpu.memory_space<vmem>>, %arg18: memref<16x32xf32, #tpu.memory_space<vmem>>) attributes {dimension_semantics = [], scalar_prefetch = 0 : i64, scratch_operands = 0 : i64, tpu.core_type = #tpu.core_type<tc>} {
    %c0 = arith.constant 0 : index
    %c0_0 = arith.constant 0 : index
    %0 = vector.load %arg0[%c0, %c0_0] : memref<16x32xf32, #tpu.memory_space<vmem>>, vector<16x32xf32>
    %c0_1 = arith.constant 0 : index
    %c0_2 = arith.constant 0 : index
    %1 = vector.load %arg1[%c0_1, %c0_2] : memref<16x32xf32, #tpu.memory_space<vmem>>, vector<16x32xf32>
    %c0_3 = arith.constant 0 : index
    %c0_4 = arith.constant 0 : index
    %2 = vector.load %arg2[%c0_3, %c0_4] : memref<8x8xf32, #tpu.memory_space<vmem>>, vector<8x8xf32>
    %c0_5 = arith.constant 0 : index
    %c0_6 = arith.constant 0 : index
    %3 = vector.load %arg3[%c0_5, %c0_6] : memref<8x1xf32, #tpu.memory_space<vmem>>, vector<8x1xf32>
    %c0_i32 = arith.constant 0 : i32
    %c2_i32 = arith.constant 2 : i32
    %4 = arith.addi %c0_i32, %c2_i32 : i32
    %c1_i32 = arith.constant 1 : i32
    %5 = scf.for %arg19 = %c0_i32 to %4 step %c1_i32 iter_args(%arg20 = %0) -> (vector<16x32xf32>)  : i32 {
      %7 = arith.index_cast %arg19 : i32 to index
      %c0_10 = arith.constant 0 : index
      %c0_11 = arith.constant 0 : index
      %8 = vector.load %arg4[%7, %c0_10, %c0_11] : memref<2x32x32xf32, #tpu.memory_space<vmem>>, vector<1x32x32xf32>
      %9 = vector.shape_cast %8 : vector<1x32x32xf32> to vector<32x32xf32>
      %cst = arith.constant dense<0.000000e+00> : vector<16x32xf32>
      %10 = tpu.matmul %arg20, %9, %cst {dimension_numbers = #tpu.dot_dimension_numbers<[1], [0], [0], [1], [0, 0, 1, 1], [], []>} : vector<16x32xf32>, vector<32x32xf32>, vector<16x32xf32> -> vector<16x32xf32>
      %11 = arith.index_cast %arg19 : i32 to index
      %c0_12 = arith.constant 0 : index
      %c0_13 = arith.constant 0 : index
      %12 = vector.load %arg5[%11, %c0_12, %c0_13] : memref<2x1x32xf32, #tpu.memory_space<vmem>>, vector<1x1x32xf32>
      %13 = vector.shape_cast %12 : vector<1x1x32xf32> to vector<1x32xf32>
      %14 = vector.broadcast %13 : vector<1x32xf32> to vector<16x32xf32>
      %15 = arith.addf %10, %14 : vector<16x32xf32>
      %16 = arith.index_cast %arg19 : i32 to index
      %c0_14 = arith.constant 0 : index
      %c0_15 = arith.constant 0 : index
      %17 = vector.load %arg6[%16, %c0_14, %c0_15] : memref<2x32x32xf32, #tpu.memory_space<vmem>>, vector<1x32x32xf32>
      %18 = vector.shape_cast %17 : vector<1x32x32xf32> to vector<32x32xf32>
      %cst_16 = arith.constant dense<0.000000e+00> : vector<16x32xf32>
      %19 = tpu.matmul %1, %18, %cst_16 {dimension_numbers = #tpu.dot_dimension_numbers<[1], [0], [0], [1], [0, 0, 1, 1], [], []>} : vector<16x32xf32>, vector<32x32xf32>, vector<16x32xf32> -> vector<16x32xf32>
      %20 = arith.index_cast %arg19 : i32 to index
      %c0_17 = arith.constant 0 : index
      %c0_18 = arith.constant 0 : index
      %21 = vector.load %arg7[%20, %c0_17, %c0_18] : memref<2x1x32xf32, #tpu.memory_space<vmem>>, vector<1x1x32xf32>
      %22 = vector.shape_cast %21 : vector<1x1x32xf32> to vector<1x32xf32>
      %23 = vector.broadcast %22 : vector<1x32xf32> to vector<16x32xf32>
      %24 = arith.addf %19, %23 : vector<16x32xf32>
      %25 = vector.shape_cast %15 : vector<16x32xf32> to vector<2x8x2x16xf32>
      %26 = tpu.transpose %25, [0, 2, 1, 3] : vector<2x8x2x16xf32> -> vector<2x2x8x16xf32>
      %27 = vector.shape_cast %26 : vector<2x2x8x16xf32> to vector<4x8x16xf32>
      %28 = vector.shape_cast %15 : vector<16x32xf32> to vector<2x8x2x16xf32>
      %29 = tpu.transpose %28, [0, 2, 1, 3] : vector<2x8x2x16xf32> -> vector<2x2x8x16xf32>
      %30 = vector.shape_cast %29 : vector<2x2x8x16xf32> to vector<4x8x16xf32>
      %31 = vector.shape_cast %24 : vector<16x32xf32> to vector<2x8x2x16xf32>
      %32 = tpu.transpose %31, [0, 2, 1, 3] : vector<2x8x2x16xf32> -> vector<2x2x8x16xf32>
      %33 = vector.shape_cast %32 : vector<2x2x8x16xf32> to vector<4x8x16xf32>
      "tpu.trace_start"() <{level = 10 : i32, message = "zid,zjd->zij"}> : () -> ()
      %cst_19 = arith.constant dense<0.000000e+00> : vector<4x8x8xf32>
      %34 = tpu.matmul %27, %30, %cst_19 {dimension_numbers = #tpu.dot_dimension_numbers<[2], [2], [1], [1], [0, 0, 0, 1, 1, 1], [0], [0]>} : vector<4x8x16xf32>, vector<4x8x16xf32>, vector<4x8x8xf32> -> vector<4x8x8xf32>
      "tpu.trace_stop"() : () -> ()
      %cst_20 = arith.constant 2.500000e-01 : f32
      %35 = vector.broadcast %cst_20 : f32 to vector<4x8x8xf32>
      %36 = arith.mulf %34, %35 : vector<4x8x8xf32>
      %37 = vector.shape_cast %2 : vector<8x8xf32> to vector<1x8x8xf32>
      %38 = vector.broadcast %37 : vector<1x8x8xf32> to vector<4x8x8xf32>
      %39 = arith.addf %36, %38 : vector<4x8x8xf32>
      %cst_21 = arith.constant dense<0xFF800000> : vector<4x8xf32>
      %40 = vector.multi_reduction <maximumf>, %39, %cst_21 [2] : vector<4x8x8xf32> to vector<4x8xf32>
      %41 = vector.shape_cast %40 : vector<4x8xf32> to vector<4x8x1xf32>
      %42 = vector.broadcast %41 : vector<4x8x1xf32> to vector<4x8x8xf32>
      %43 = arith.subf %39, %42 : vector<4x8x8xf32>
      %44 = math.exp %43 : vector<4x8x8xf32>
      %cst_22 = arith.constant dense<0.000000e+00> : vector<4x8xf32>
      %45 = vector.multi_reduction <add>, %44, %cst_22 [2] : vector<4x8x8xf32> to vector<4x8xf32>
      %46 = vector.shape_cast %45 : vector<4x8xf32> to vector<4x8x1xf32>
      %47 = tpu.reciprocal %46 {approx = true} : vector<4x8x1xf32> -> vector<4x8x1xf32>
      %48 = vector.broadcast %47 : vector<4x8x1xf32> to vector<4x8x8xf32>
      %49 = arith.mulf %44, %48 : vector<4x8x8xf32>
      %50 = vector.shape_cast %3 : vector<8x1xf32> to vector<1x8x1xf32>
      %51 = vector.broadcast %50 : vector<1x8x1xf32> to vector<4x8x8xf32>
      %52 = arith.mulf %49, %51 : vector<4x8x8xf32>
      "tpu.trace_start"() <{level = 10 : i32, message = "zij,zjd->zid"}> : () -> ()
      %cst_23 = arith.constant dense<0.000000e+00> : vector<4x8x16xf32>
      %53 = tpu.matmul %52, %33, %cst_23 {dimension_numbers = #tpu.dot_dimension_numbers<[2], [1], [1], [2], [0, 0, 0, 1, 1, 2], [0], [0]>} : vector<4x8x8xf32>, vector<4x8x16xf32>, vector<4x8x16xf32> -> vector<4x8x16xf32>
      "tpu.trace_stop"() : () -> ()
      %54 = vector.shape_cast %53 : vector<4x8x16xf32> to vector<2x2x8x16xf32>
      %55 = tpu.transpose %54, [0, 2, 1, 3] : vector<2x2x8x16xf32> -> vector<2x8x2x16xf32>
      %56 = vector.shape_cast %55 : vector<2x8x2x16xf32> to vector<16x32xf32>
      %57 = arith.index_cast %arg19 : i32 to index
      %c0_24 = arith.constant 0 : index
      %c0_25 = arith.constant 0 : index
      %58 = vector.load %arg8[%57, %c0_24, %c0_25] : memref<2x32x32xf32, #tpu.memory_space<vmem>>, vector<1x32x32xf32>
      %59 = vector.shape_cast %58 : vector<1x32x32xf32> to vector<32x32xf32>
      %cst_26 = arith.constant dense<0.000000e+00> : vector<16x32xf32>
      %60 = tpu.matmul %56, %59, %cst_26 {dimension_numbers = #tpu.dot_dimension_numbers<[1], [0], [0], [1], [0, 0, 1, 1], [], []>} : vector<16x32xf32>, vector<32x32xf32>, vector<16x32xf32> -> vector<16x32xf32>
      %61 = arith.index_cast %arg19 : i32 to index
      %c0_27 = arith.constant 0 : index
      %c0_28 = arith.constant 0 : index
      %62 = vector.load %arg9[%61, %c0_27, %c0_28] : memref<2x1x32xf32, #tpu.memory_space<vmem>>, vector<1x1x32xf32>
      %63 = vector.shape_cast %62 : vector<1x1x32xf32> to vector<1x32xf32>
      %64 = vector.broadcast %63 : vector<1x32xf32> to vector<16x32xf32>
      %65 = arith.addf %60, %64 : vector<16x32xf32>
      %66 = arith.addf %arg20, %65 : vector<16x32xf32>
      %67 = arith.index_cast %arg19 : i32 to index
      %c0_29 = arith.constant 0 : index
      %c0_30 = arith.constant 0 : index
      %68 = vector.load %arg10[%67, %c0_29, %c0_30] : memref<2x1x32xf32, #tpu.memory_space<vmem>>, vector<1x1x32xf32>
      %69 = vector.shape_cast %68 : vector<1x1x32xf32> to vector<1x32xf32>
      %70 = arith.index_cast %arg19 : i32 to index
      %c0_31 = arith.constant 0 : index
      %c0_32 = arith.constant 0 : index
      %71 = vector.load %arg11[%70, %c0_31, %c0_32] : memref<2x1x32xf32, #tpu.memory_space<vmem>>, vector<1x1x32xf32>
      %72 = vector.shape_cast %71 : vector<1x1x32xf32> to vector<1x32xf32>
      %cst_33 = arith.constant dense<0.000000e+00> : vector<16xf32>
      %73 = vector.multi_reduction <add>, %66, %cst_33 [1] : vector<16x32xf32> to vector<16xf32>
      %74 = vector.shape_cast %73 : vector<16xf32> to vector<16x1xf32>
      %cst_34 = arith.constant 3.200000e+01 : f32
      %75 = vector.broadcast %cst_34 : f32 to vector<16x1xf32>
      %76 = arith.divf %74, %75 : vector<16x1xf32>
      %77 = vector.broadcast %76 : vector<16x1xf32> to vector<16x32xf32>
      %78 = arith.subf %66, %77 : vector<16x32xf32>
      %79 = arith.mulf %78, %78 : vector<16x32xf32>
      %cst_35 = arith.constant dense<0.000000e+00> : vector<16xf32>
      %80 = vector.multi_reduction <add>, %79, %cst_35 [1] : vector<16x32xf32> to vector<16xf32>
      %81 = vector.shape_cast %80 : vector<16xf32> to vector<16x1xf32>
      %cst_36 = arith.constant 3.200000e+01 : f32
      %82 = vector.broadcast %cst_36 : f32 to vector<16x1xf32>
      %83 = arith.divf %81, %82 : vector<16x1xf32>
      %84 = vector.broadcast %76 : vector<16x1xf32> to vector<16x32xf32>
      %85 = arith.subf %66, %84 : vector<16x32xf32>
      %cst_37 = arith.constant 9.99999974E-6 : f32
      %86 = vector.broadcast %cst_37 : f32 to vector<16x1xf32>
      %87 = arith.addf %83, %86 : vector<16x1xf32>
      %88 = math.rsqrt %87 : vector<16x1xf32>
      %89 = vector.broadcast %88 : vector<16x1xf32> to vector<16x32xf32>
      %90 = arith.mulf %85, %89 : vector<16x32xf32>
      %91 = vector.broadcast %69 : vector<1x32xf32> to vector<16x32xf32>
      %92 = arith.mulf %90, %91 : vector<16x32xf32>
      %93 = vector.broadcast %72 : vector<1x32xf32> to vector<16x32xf32>
      %94 = arith.addf %92, %93 : vector<16x32xf32>
      %95 = arith.index_cast %arg19 : i32 to index
      %c0_38 = arith.constant 0 : index
      %c0_39 = arith.constant 0 : index
      %96 = vector.load %arg12[%95, %c0_38, %c0_39] : memref<2x32x64xf32, #tpu.memory_space<vmem>>, vector<1x32x64xf32>
      %97 = vector.shape_cast %96 : vector<1x32x64xf32> to vector<32x64xf32>
      %cst_40 = arith.constant dense<0.000000e+00> : vector<16x64xf32>
      %98 = tpu.matmul %94, %97, %cst_40 {dimension_numbers = #tpu.dot_dimension_numbers<[1], [0], [0], [1], [0, 0, 1, 1], [], []>} : vector<16x32xf32>, vector<32x64xf32>, vector<16x64xf32> -> vector<16x64xf32>
      %99 = arith.index_cast %arg19 : i32 to index
      %c0_41 = arith.constant 0 : index
      %c0_42 = arith.constant 0 : index
      %100 = vector.load %arg13[%99, %c0_41, %c0_42] : memref<2x1x64xf32, #tpu.memory_space<vmem>>, vector<1x1x64xf32>
      %101 = vector.shape_cast %100 : vector<1x1x64xf32> to vector<1x64xf32>
      %102 = vector.broadcast %101 : vector<1x64xf32> to vector<16x64xf32>
      %103 = arith.addf %98, %102 : vector<16x64xf32>
      %cst_43 = arith.constant 0.000000e+00 : f32
      %104 = vector.broadcast %cst_43 : f32 to vector<16x64xf32>
      %105 = arith.maximumf %103, %104 : vector<16x64xf32>
      %106 = arith.index_cast %arg19 : i32 to index
      %c0_44 = arith.constant 0 : index
      %c0_45 = arith.constant 0 : index
      %107 = vector.load %arg14[%106, %c0_44, %c0_45] : memref<2x64x32xf32, #tpu.memory_space<vmem>>, vector<1x64x32xf32>
      %108 = vector.shape_cast %107 : vector<1x64x32xf32> to vector<64x32xf32>
      %cst_46 = arith.constant dense<0.000000e+00> : vector<16x32xf32>
      %109 = tpu.matmul %105, %108, %cst_46 {dimension_numbers = #tpu.dot_dimension_numbers<[1], [0], [0], [1], [0, 0, 1, 1], [], []>} : vector<16x64xf32>, vector<64x32xf32>, vector<16x32xf32> -> vector<16x32xf32>
      %110 = arith.index_cast %arg19 : i32 to index
      %c0_47 = arith.constant 0 : index
      %c0_48 = arith.constant 0 : index
      %111 = vector.load %arg15[%110, %c0_47, %c0_48] : memref<2x1x32xf32, #tpu.memory_space<vmem>>, vector<1x1x32xf32>
      %112 = vector.shape_cast %111 : vector<1x1x32xf32> to vector<1x32xf32>
      %113 = vector.broadcast %112 : vector<1x32xf32> to vector<16x32xf32>
      %114 = arith.addf %109, %113 : vector<16x32xf32>
      %115 = arith.addf %94, %114 : vector<16x32xf32>
      %116 = arith.index_cast %arg19 : i32 to index
      %c0_49 = arith.constant 0 : index
      %c0_50 = arith.constant 0 : index
      %117 = vector.load %arg16[%116, %c0_49, %c0_50] : memref<2x1x32xf32, #tpu.memory_space<vmem>>, vector<1x1x32xf32>
      %118 = vector.shape_cast %117 : vector<1x1x32xf32> to vector<1x32xf32>
      %119 = arith.index_cast %arg19 : i32 to index
      %c0_51 = arith.constant 0 : index
      %c0_52 = arith.constant 0 : index
      %120 = vector.load %arg17[%119, %c0_51, %c0_52] : memref<2x1x32xf32, #tpu.memory_space<vmem>>, vector<1x1x32xf32>
      %121 = vector.shape_cast %120 : vector<1x1x32xf32> to vector<1x32xf32>
      %cst_53 = arith.constant dense<0.000000e+00> : vector<16xf32>
      %122 = vector.multi_reduction <add>, %115, %cst_53 [1] : vector<16x32xf32> to vector<16xf32>
      %123 = vector.shape_cast %122 : vector<16xf32> to vector<16x1xf32>
      %cst_54 = arith.constant 3.200000e+01 : f32
      %124 = vector.broadcast %cst_54 : f32 to vector<16x1xf32>
      %125 = arith.divf %123, %124 : vector<16x1xf32>
      %126 = vector.broadcast %125 : vector<16x1xf32> to vector<16x32xf32>
      %127 = arith.subf %115, %126 : vector<16x32xf32>
      %128 = arith.mulf %127, %127 : vector<16x32xf32>
      %cst_55 = arith.constant dense<0.000000e+00> : vector<16xf32>
      %129 = vector.multi_reduction <add>, %128, %cst_55 [1] : vector<16x32xf32> to vector<16xf32>
      %130 = vector.shape_cast %129 : vector<16xf32> to vector<16x1xf32>
      %cst_56 = arith.constant 3.200000e+01 : f32
      %131 = vector.broadcast %cst_56 : f32 to vector<16x1xf32>
      %132 = arith.divf %130, %131 : vector<16x1xf32>
      %133 = vector.broadcast %125 : vector<16x1xf32> to vector<16x32xf32>
      %134 = arith.subf %115, %133 : vector<16x32xf32>
      %cst_57 = arith.constant 9.99999974E-6 : f32
      %135 = vector.broadcast %cst_57 : f32 to vector<16x1xf32>
      %136 = arith.addf %132, %135 : vector<16x1xf32>
      %137 = math.rsqrt %136 : vector<16x1xf32>
      %138 = vector.broadcast %137 : vector<16x1xf32> to vector<16x32xf32>
      %139 = arith.mulf %134, %138 : vector<16x32xf32>
      %140 = vector.broadcast %118 : vector<1x32xf32> to vector<16x32xf32>
      %141 = arith.mulf %139, %140 : vector<16x32xf32>
      %142 = vector.broadcast %121 : vector<1x32xf32> to vector<16x32xf32>
      %143 = arith.addf %141, %142 : vector<16x32xf32>
      scf.yield %143 : vector<16x32xf32>
    }
    %c2_i32_7 = arith.constant 2 : i32
    %c0_8 = arith.constant 0 : index
    %c0_9 = arith.constant 0 : index
    %6 = vector.load %arg18[%c0_8, %c0_9] : memref<16x32xf32, #tpu.memory_space<vmem>>, vector<16x32xf32>
    tpu.vector_store %arg18[%c0_8, %c0_9], %5 {strides = array<i32>} : memref<16x32xf32, #tpu.memory_space<vmem>>, vector<16x32xf32>,
    return
  }
}

</mosaic_0001>

<llo_original>
// kernel: tpu_custom_call.1
$region0: #{tpu_custom_call.1}
  #allocation0 [shape = 'u32[]', space=smem, size = 0x4, offset = 0x4, fixed_abs, tag = 'smem constant byte address 0x4 - core index']
  #allocation1 [shape = 'u32[72,128]{1,0:T(1,128)}', space=vmem, size = 0x9000, scoped, tag = 'internal scratch']
  %s0 = inlined_call_operand.hbm [shape: f32[16,32], index: 0, kind: input, shape index: {}]
  %s1 = inlined_call_operand.hbm [shape: f32[16,32], index: 1, kind: input, shape index: {}]
  %s2 = inlined_call_operand.vmem [shape: f32[8,8], index: 2, kind: input, shape index: {}]
  %s3 = inlined_call_operand.vmem [shape: f32[8,1], index: 3, kind: input, shape index: {}]
  %s4 = inlined_call_operand.vmem [shape: f32[2,32,32], index: 4, kind: input, shape index: {}]
  %s5 = inlined_call_operand.hbm [shape: f32[2,1,32], index: 5, kind: input, shape index: {}]
  %s6 = inlined_call_operand.vmem [shape: f32[2,32,32], index: 6, kind: input, shape index: {}]
  %s7 = inlined_call_operand.vmem [shape: f32[2,1,32], index: 7, kind: input, shape index: {}]
  %s8 = inlined_call_operand.vmem [shape: f32[2,32,32], index: 8, kind: input, shape index: {}]
  %s9 = inlined_call_operand.vmem [shape: f32[2,1,32], index: 9, kind: input, shape index: {}]
  %s10 = inlined_call_operand.vmem [shape: f32[2,1,32], index: 10, kind: input, shape index: {}]
  %s11 = inlined_call_operand.hbm [shape: f32[2,1,32], index: 11, kind: input, shape index: {}]
  %s12 = inlined_call_operand.hbm [shape: f32[2,32,64], index: 12, kind: input, shape index: {}]
  %s13 = inlined_call_operand.vmem [shape: f32[2,1,64], index: 13, kind: input, shape index: {}]
  %s14 = inlined_call_operand.vmem [shape: f32[2,64,32], index: 14, kind: input, shape index: {}]
  %s15 = inlined_call_operand.vmem [shape: f32[2,1,32], index: 15, kind: input, shape index: {}]
  %s16 = inlined_call_operand.vmem [shape: f32[2,1,32], index: 16, kind: input, shape index: {}]
  %s17 = inlined_call_operand.hbm [shape: f32[2,1,32], index: 17, kind: input, shape index: {}]
  %s18 = inlined_call_operand.hbm [shape: f32[16,32], index: 18, kind: output, shape index: {}]
  %s19 = sld [smem:[#allocation0]]
  $region113: #{tpu_custom_call.1} parent=0
    _
  %s21 = ssub.s32 1, %s19
  %s22 = scalar_select 0, %s21, %s19
  $region1: #{tpu_custom_call.1} parent=0
    #allocation2 [shape = 'u8[8192]{0}', space=vmem, size = 0x2000, scoped, tag = 'input window, operand 0, single buffered']
    #allocation3 [shape = 's32[1]{0}', space=sflag, size = 0x4, scoped, tag = 'scoped memory for tpu_custom_call.1']
    #allocation4 [shape = 's32[1]{0}', space=sflag, size = 0x4, scoped, tag = 'scoped memory for tpu_custom_call.1']
    #allocation5 [shape = 'u8[8192]{0}', space=vmem, size = 0x2000, scoped, tag = 'input window, operand 1, single buffered']
    #allocation6 [shape = 's32[1]{0}', space=sflag, size = 0x4, scoped, tag = 'scoped memory for tpu_custom_call.1']
    #allocation7 [shape = 'u8[1024]{0}', space=vmem, size = 0x400, scoped, tag = 'input window, operand 5, single buffered']
    #allocation8 [shape = 'u8[1024]{0}', space=vmem, size = 0x400, scoped, tag = 'input window, operand 11, single buffered']
    #allocation9 [shape = 's32[1]{0}', space=sflag, size = 0x4, scoped, tag = 'scoped memory for tpu_custom_call.1']
    #allocation10 [shape = 'u8[32768]{0}', space=vmem, size = 0x8000, scoped, tag = 'input window, operand 12, single buffered']
    #allocation11 [shape = 'u8[1024]{0}', space=vmem, size = 0x400, scoped, tag = 'input window, operand 17, single buffered']
    #allocation12 [shape = 's32[1]{0}', space=sflag, size = 0x4, scoped, tag = 'scoped memory for tpu_custom_call.1']
    #allocation13 [shape = 'u8[8192]{0}', space=vmem, size = 0x2000, scoped, tag = 'output window, operand 0, single buffered']
    %23 = vsyncpa [#allocation3], 0
    %24 = vsyncpa [#allocation6], 0
    %25 = vsyncpa [#allocation9], 0
    %26 = vsyncpa [#allocation12], 0
    %27 = vsyncpa [#allocation4], 0
    // Predicated region
    $region2: #{tpu_custom_call.1} parent=1 // pred_check
      _
    $region3: #{tpu_custom_call.1} parent=1 // pred_check_branch
      %29 = sbr.rel (0) target = $region5
    $region4: #{tpu_custom_call.1} parent=1 // pred_region
      %31 = vsyncadd [#allocation3], 0
      %s32 = sshll.u32 %s0, 4
      %s33 = int_to_ptr.hbm [resolvable:$true] %s32
      %s34 = sshll.u32 [#allocation2], 4
      %s35 = int_to_ptr.vmem [resolvable:$true] %s34
      %40 = dma.hbm_to_vmem [thread:$0]  %s33, 256, %s35, [#allocation3], 128, 128, 8
    $region5: #{tpu_custom_call.1} parent=1 // pred_fallthru
      _
    // Predicated region
    $region6: #{tpu_custom_call.1} parent=1 // pred_check
      _
    $region7: #{tpu_custom_call.1} parent=1 // pred_check_branch
      %42 = sbr.rel (0) target = $region9
    $region8: #{tpu_custom_call.1} parent=1 // pred_region
      %44 = vsyncadd [#allocation6], 0
      %s45 = sshll.u32 %s1, 4
      %s46 = int_to_ptr.hbm [resolvable:$true] %s45
      %s47 = sshll.u32 [#allocation5], 4
      %s48 = int_to_ptr.vmem [resolvable:$true] %s47
      %53 = dma.hbm_to_vmem [thread:$0]  %s46, 256, %s48, [#allocation6], 128, 128, 8
    $region9: #{tpu_custom_call.1} parent=1 // pred_fallthru
      _
    // Predicated region
    $region10: #{tpu_custom_call.1} parent=1 // pred_check
      _
    $region11: #{tpu_custom_call.1} parent=1 // pred_check_branch
      %55 = sbr.rel (0) target = $region13
    $region12: #{tpu_custom_call.1} parent=1 // pred_region
      _
    $region13: #{tpu_custom_call.1} parent=1 // pred_fallthru
      _
    // Predicated region
    $region14: #{tpu_custom_call.1} parent=1 // pred_check
      _
    $region15: #{tpu_custom_call.1} parent=1 // pred_check_branch
      %57 = sbr.rel (0) target = $region17
    $region16: #{tpu_custom_call.1} parent=1 // pred_region
      _
    $region17: #{tpu_custom_call.1} parent=1 // pred_fallthru
      _
    // Predicated region
    $region18: #{tpu_custom_call.1} parent=1 // pred_check
      _
    $region19: #{tpu_custom_call.1} parent=1 // pred_check_branch
      %59 = sbr.rel (0) target = $region21
    $region20: #{tpu_custom_call.1} parent=1 // pred_region
      _
    $region21: #{tpu_custom_call.1} parent=1 // pred_fallthru
      _
    // Predicated region
    $region22: #{tpu_custom_call.1} parent=1 // pred_check
      _
    $region23: #{tpu_custom_call.1} parent=1 // pred_check_branch
      %61 = sbr.rel (0) target = $region25
    $region24: #{tpu_custom_call.1} parent=1 // pred_region
      %63 = vsyncadd [#allocation6], 0
      %s64 = sshll.u32 %s5, 4
      %s65 = int_to_ptr.hbm [resolvable:$true] %s64
      %s66 = sshll.u32 [#allocation7], 4
      %s67 = int_to_ptr.vmem [resolvable:$true] %s66
      %72 = dma.hbm_to_vmem [thread:$0]  %s65, 32, %s67, [#allocation6], 16, 16, 1
    $region25: #{tpu_custom_call.1} parent=1 // pred_fallthru
      _
    // Predicated region
    $region26: #{tpu_custom_call.1} parent=1 // pred_check
      _
    $region27: #{tpu_custom_call.1} parent=1 // pred_check_branch
      %74 = sbr.rel (0) target = $region29
    $region28: #{tpu_custom_call.1} parent=1 // pred_region
      _
    $region29: #{tpu_custom_call.1} parent=1 // pred_fallthru
      _
    // Predicated region
    $region30: #{tpu_custom_call.1} parent=1 // pred_check
      _
    $region31: #{tpu_custom_call.1} parent=1 // pred_check_branch
      %76 = sbr.rel (0) target = $region33
    $region32: #{tpu_custom_call.1} parent=1 // pred_region
      _
    $region33: #{tpu_custom_call.1} parent=1 // pred_fallthru
      _
    // Predicated region
    $region34: #{tpu_custom_call.1} parent=1 // pred_check
      _
    $region35: #{tpu_custom_call.1} parent=1 // pred_check_branch
      %78 = sbr.rel (0) target = $region37
    $region36: #{tpu_custom_call.1} parent=1 // pred_region
      _
    $region37: #{tpu_custom_call.1} parent=1 // pred_fallthru
      _
    // Predicated region
    $region38: #{tpu_custom_call.1} parent=1 // pred_check
      _
    $region39: #{tpu_custom_call.1} parent=1 // pred_check_branch
      %80 = sbr.rel (0) target = $region41
    $region40: #{tpu_custom_call.1} parent=1 // pred_region
      _
    $region41: #{tpu_custom_call.1} parent=1 // pred_fallthru
      _
    // Predicated region
    $region42: #{tpu_custom_call.1} parent=1 // pred_check
      _
    $region43: #{tpu_custom_call.1} parent=1 // pred_check_branch
      %82 = sbr.rel (0) target = $region45
    $region44: #{tpu_custom_call.1} parent=1 // pred_region
      _
    $region45: #{tpu_custom_call.1} parent=1 // pred_fallthru
      _
    // Predicated region
    $region46: #{tpu_custom_call.1} parent=1 // pred_check
      _
    $region47: #{tpu_custom_call.1} parent=1 // pred_check_branch
      %84 = sbr.rel (0) target = $region49
    $region48: #{tpu_custom_call.1} parent=1 // pred_region
      %86 = vsyncadd [#allocation9], 0
      %s87 = sshll.u32 %s11, 4
      %s88 = int_to_ptr.hbm [resolvable:$true] %s87
      %s89 = sshll.u32 [#allocation8], 4
      %s90 = int_to_ptr.vmem [resolvable:$true] %s89
      %95 = dma.hbm_to_vmem [thread:$0]  %s88, 32, %s90, [#allocation9], 16, 16, 1
    $region49: #{tpu_custom_call.1} parent=1 // pred_fallthru
      _
    // Predicated region
    $region50: #{tpu_custom_call.1} parent=1 // pred_check
      _
    $region51: #{tpu_custom_call.1} parent=1 // pred_check_branch
      %97 = sbr.rel (0) target = $region53
    $region52: #{tpu_custom_call.1} parent=1 // pred_region
      %99 = vsyncadd [#allocation9], 0
      %s100 = sshll.u32 %s12, 4
      %s101 = int_to_ptr.hbm [resolvable:$true] %s100
      %s102 = sshll.u32 [#allocation10], 4
      %s103 = int_to_ptr.vmem [resolvable:$true] %s102
      %108 = dma.hbm_to_vmem [thread:$0]  %s101, 1024, %s103, [#allocation9], 128, 128, 8
    $region53: #{tpu_custom_call.1} parent=1 // pred_fallthru
      _
    // Predicated region
    $region54: #{tpu_custom_call.1} parent=1 // pred_check
      _
    $region55: #{tpu_custom_call.1} parent=1 // pred_check_branch
      %110 = sbr.rel (0) target = $region57
    $region56: #{tpu_custom_call.1} parent=1 // pred_region
      _
    $region57: #{tpu_custom_call.1} parent=1 // pred_fallthru
      _
    // Predicated region
    $region58: #{tpu_custom_call.1} parent=1 // pred_check
      _
    $region59: #{tpu_custom_call.1} parent=1 // pred_check_branch
      %112 = sbr.rel (0) target = $region61
    $region60: #{tpu_custom_call.1} parent=1 // pred_region
      _
    $region61: #{tpu_custom_call.1} parent=1 // pred_fallthru
      _
    // Predicated region
    $region62: #{tpu_custom_call.1} parent=1 // pred_check
      _
    $region63: #{tpu_custom_call.1} parent=1 // pred_check_branch
      %114 = sbr.rel (0) target = $region65
    $region64: #{tpu_custom_call.1} parent=1 // pred_region
      _
    $region65: #{tpu_custom_call.1} parent=1 // pred_fallthru
      _
    // Predicated region
    $region66: #{tpu_custom_call.1} parent=1 // pred_check
      _
    $region67: #{tpu_custom_call.1} parent=1 // pred_check_branch
      %116 = sbr.rel (0) target = $region69
    $region68: #{tpu_custom_call.1} parent=1 // pred_region
      _
    $region69: #{tpu_custom_call.1} parent=1 // pred_fallthru
      _
    // Predicated region
    $region70: #{tpu_custom_call.1} parent=1 // pred_check
      _
    $region71: #{tpu_custom_call.1} parent=1 // pred_check_branch
      %118 = sbr.rel (0) target = $region73
    $region72: #{tpu_custom_call.1} parent=1 // pred_region
      %120 = vsyncadd [#allocation12], 0
      %s121 = sshll.u32 %s17, 4
      %s122 = int_to_ptr.hbm [resolvable:$true] %s121
      %s123 = sshll.u32 [#allocation11], 4
      %s124 = int_to_ptr.vmem [resolvable:$true] %s123
      %129 = dma.hbm_to_vmem [thread:$0]  %s122, 32, %s124, [#allocation12], 16, 16, 1
    $region73: #{tpu_custom_call.1} parent=1 // pred_fallthru
      _
    // Predicated region
    $region74: #{tpu_custom_call.1} parent=1 // pred_check
      _
    $region75: #{tpu_custom_call.1} parent=1 // pred_check_branch
      %131 = sbr.rel (0) target = $region77
    $region76: #{tpu_custom_call.1} parent=1 // pred_region
      %133 = dma.done [#allocation3], 256
    $region77: #{tpu_custom_call.1} parent=1 // pred_fallthru
      _
    // Predicated region
    $region78: #{tpu_custom_call.1} parent=1 // pred_check
      _
    $region79: #{tpu_custom_call.1} parent=1 // pred_check_branch
      %135 = sbr.rel (0) target = $region81
    $region80: #{tpu_custom_call.1} parent=1 // pred_region
      %137 = dma.done [#allocation6], 256
    $region81: #{tpu_custom_call.1} parent=1 // pred_fallthru
      _
    // Predicated region
    $region82: #{tpu_custom_call.1} parent=1 // pred_check
      _
    $region83: #{tpu_custom_call.1} parent=1 // pred_check_branch
      %139 = sbr.rel (0) target = $region85
    $region84: #{tpu_custom_call.1} parent=1 // pred_region
      %141 = dma.done [#allocation6], 32
    $region85: #{tpu_custom_call.1} parent=1 // pred_fallthru
      _
    // Predicated region
    $region86: #{tpu_custom_call.1} parent=1 // pred_check
      _
    $region87: #{tpu_custom_call.1} parent=1 // pred_check_branch
      %143 = sbr.rel (0) target = $region89
    $region88: #{tpu_custom_call.1} parent=1 // pred_region
      %145 = dma.done [#allocation9], 32
    $region89: #{tpu_custom_call.1} parent=1 // pred_fallthru
      _
    // Predicated region
    $region90: #{tpu_custom_call.1} parent=1 // pred_check
      _
    $region91: #{tpu_custom_call.1} parent=1 // pred_check_branch
      %147 = sbr.rel (0) target = $region93
    $region92: #{tpu_custom_call.1} parent=1 // pred_region
      %149 = dma.done [#allocation9], 1024
    $region93: #{tpu_custom_call.1} parent=1 // pred_fallthru
      _
    // Predicated region
    $region94: #{tpu_custom_call.1} parent=1 // pred_check
      _
    $region95: #{tpu_custom_call.1} parent=1 // pred_check_branch
      %151 = sbr.rel (0) target = $region97
    $region96: #{tpu_custom_call.1} parent=1 // pred_region
      %153 = dma.done [#allocation12], 32
    $region97: #{tpu_custom_call.1} parent=1 // pred_fallthru
      _
    %v154 = vld [vmem:[#allocation2] sm:$0xff]
    %v155 = vld [vmem:[#allocation2 + $0x8] sm:$0xff]
    %v156 = vld [vmem:[#allocation5] sm:$0xff]
    %v157 = vld [vmem:[#allocation5 + $0x8] sm:$0xff]
    %v158 = vld [vmem:[%s2] sm:$0xff]
    %v159 = vld [vmem:[%s3] sm:$0xff]
    loop: start=0, step=1, limit=2
    $region98: #{tpu_custom_call.1} parent=1 // loop_pre_header
      _
    $region99: #{tpu_custom_call.1} parent=1 // loop_header
      %s161 = sphi 0, %s165
      %p162 = scmp.ge.s32.totalorder %s161, 2
      %v166 = vphi %v154, %v1312
      %v167 = vphi %v155, %v1313
    $region100: #{tpu_custom_call.1} parent=1 // loop_header_branch
      %164 = sbr.rel (%p162) target = $region104
    $region101: #{tpu_custom_call.1} parent=1 // loop_body
      %s168 = smul.u32 %s161, 32
      %s169 = scalar_lea.vmem %s4, %s168
      %v170 = vld [vmem:[%s169] sm:$0xff]
      %v171 = vld [vmem:[%s169 + $0x8] sm:$0xff]
      %v172 = vld [vmem:[%s169 + $0x10] sm:$0xff]
      %v173 = vld [vmem:[%s169 + $0x18] sm:$0xff]
      %s174 = scalar_lea.vmem [#allocation7], %s161
      %v175 = vld [vmem:[%s174] sm:$0x1]
      %v177 = vperm.slane %v175, 0
      %vm179 = vcmask 261120
      %v181 = vsel %vm179, %v166, 0
      %v184 = vsel %vm179, %v167, 0
      %186 = vmatpush.msra.mxu0 0.0
      %187 = vmatpush.msra.mxu0 0.0
      %188 = vmatpush.msra.mxu0 0.0
      %189 = vmatpush.msra.mxu0 0.0
      %190 = vmatpush.msra.mxu0 0.0
      %191 = vmatpush.msra.mxu0 0.0
      %192 = vmatpush.msra.mxu0 0.0
      %193 = vmatpush.msra.mxu0 0.0
      %194 = vmatpush.msra.mxu0 0.0
      %195 = vmatpush.msra.mxu0 0.0
      %196 = vmatpush.msra.mxu0 0.0
      %197 = vmatpush.msra.mxu0 0.0
      %198 = vmatpush.msra.mxu0 %v173
      %199 = vmatpush.msra.mxu0 %v172
      %200 = vmatpush.msra.mxu0 %v171
      %201 = vmatpush.msra.mxu0 %v170
      %202 = vmatmul.f32.gmra.mxu0 %v181
      %v203 = vpop.f32.mrf.mxu0
      %v204 = vadd.f32 %v177, %v203
      %205 = vmatmul.f32.gmra.mxu0 %v184
      %v206 = vpop.f32.mrf.mxu0
      %v207 = vadd.f32 %v177, %v206
      %208 = vdwg.mxu0
      %s209 = scalar_lea.vmem %s6, %s168
      %v210 = vld [vmem:[%s209] sm:$0xff]
      %v211 = vld [vmem:[%s209 + $0x8] sm:$0xff]
      %v212 = vld [vmem:[%s209 + $0x10] sm:$0xff]
      %v213 = vld [vmem:[%s209 + $0x18] sm:$0xff]
      %s214 = scalar_lea.vmem %s7, %s161
      %v215 = vld [vmem:[%s214] sm:$0x1]
      %v217 = vperm.slane %v215, 0
      %v220 = vsel %vm179, %v156, 0
      %v223 = vsel %vm179, %v157, 0
      %225 = vmatpush.msra.mxu0 0.0
      %226 = vmatpush.msra.mxu0 0.0
      %227 = vmatpush.msra.mxu0 0.0
      %228 = vmatpush.msra.mxu0 0.0
      %229 = vmatpush.msra.mxu0 0.0
      %230 = vmatpush.msra.mxu0 0.0
      %231 = vmatpush.msra.mxu0 0.0
      %232 = vmatpush.msra.mxu0 0.0
      %233 = vmatpush.msra.mxu0 0.0
      %234 = vmatpush.msra.mxu0 0.0
      %235 = vmatpush.msra.mxu0 0.0
      %236 = vmatpush.msra.mxu0 0.0
      %237 = vmatpush.msra.mxu0 %v213
      %238 = vmatpush.msra.mxu0 %v212
      %239 = vmatpush.msra.mxu0 %v211
      %240 = vmatpush.msra.mxu0 %v210
      %241 = vmatmul.f32.gmra.mxu0 %v220
      %v242 = vpop.f32.mrf.mxu0
      %v243 = vadd.f32 %v217, %v242
      %244 = vmatmul.f32.gmra.mxu0 %v223
      %v245 = vpop.f32.mrf.mxu0
      %v246 = vadd.f32 %v217, %v245
      %247 = vdwg.mxu0
      %250 = vrot.lane.b32.xlu0 %v204, 112
      %v251 = vpop.permute.xlu0 %250
      %252 = vrot.lane.b32.xlu0 %v207, 112
      %v253 = vpop.permute.xlu0 %252
      %v256 = vrot.slane %v204, 4
      %vm257 = vcmask 1047556
      %v258 = vsel %vm257, 0.0, %v256
      %v260 = vunpack.c.l.s4 1983009808
      %v261 = vunpack.c.0.s8 %v260
      %v262 = vperm.slane %v204, %v261
      %v264 = vunpack.c.l.s4 1983009808
      %v265 = vunpack.c.0.s8 %v264
      %v266 = vperm.slane %v258, %v265
      %v267 = vrot.slane %v251, 4
      %v268 = vsel %vm257, 0.0, %v267
      %v270 = vunpack.c.l.s4 1983009808
      %v271 = vunpack.c.0.s8 %v270
      %v272 = vperm.slane %v251, %v271
      %v274 = vunpack.c.l.s4 1983009808
      %v275 = vunpack.c.0.s8 %v274
      %v276 = vperm.slane %v268, %v275
      %v277 = vrot.slane %v272, 4
      %v278 = vsel %vm257, %v277, %v262
      %v279 = vrot.slane %v262, 4
      %v280 = vsel %vm257, %v272, %v279
      %v282 = vunpack.c.l.s4 1934713408
      %v283 = vunpack.c.0.s8 %v282
      %v284 = vperm.slane %v278, %v283
      %v286 = vunpack.c.l.s4 1934713408
      %v287 = vunpack.c.0.s8 %v286
      %v288 = vperm.slane %v280, %v287
      %v289 = vrot.slane %v276, 4
      %v290 = vsel %vm257, %v289, %v266
      %v291 = vrot.slane %v266, 4
      %v292 = vsel %vm257, %v276, %v291
      %v294 = vunpack.c.l.s4 1934713408
      %v295 = vunpack.c.0.s8 %v294
      %v296 = vperm.slane %v290, %v295
      %v298 = vunpack.c.l.s4 1934713408
      %v299 = vunpack.c.0.s8 %v298
      %v300 = vperm.slane %v292, %v299
      %v301 = vrot.slane %v284, 4
      %v302 = vsel %vm257, 0.0, %v301
      %v303 = vrot.slane %v288, 4
      %v304 = vsel %vm257, 0.0, %v303
      %v305 = vrot.slane %v296, 4
      %v306 = vsel %vm257, 0.0, %v305
      %v307 = vrot.slane %v300, 4
      %v308 = vsel %vm257, 0.0, %v307
      %v309 = vrot.slane %v207, 4
      %v310 = vsel %vm257, 0.0, %v309
      %v312 = vunpack.c.l.s4 1983009808
      %v313 = vunpack.c.0.s8 %v312
      %v314 = vperm.slane %v207, %v313
      %v316 = vunpack.c.l.s4 1983009808
      %v317 = vunpack.c.0.s8 %v316
      %v318 = vperm.slane %v310, %v317
      %v319 = vrot.slane %v253, 4
      %v320 = vsel %vm257, 0.0, %v319
      %v322 = vunpack.c.l.s4 1983009808
      %v323 = vunpack.c.0.s8 %v322
      %v324 = vperm.slane %v253, %v323
      %v326 = vunpack.c.l.s4 1983009808
      %v327 = vunpack.c.0.s8 %v326
      %v328 = vperm.slane %v320, %v327
      %v329 = vrot.slane %v324, 4
      %v330 = vsel %vm257, %v329, %v314
      %v331 = vrot.slane %v314, 4
      %v332 = vsel %vm257, %v324, %v331
      %v334 = vunpack.c.l.s4 1934713408
      %v335 = vunpack.c.0.s8 %v334
      %v336 = vperm.slane %v330, %v335
      %v338 = vunpack.c.l.s4 1934713408
      %v339 = vunpack.c.0.s8 %v338
      %v340 = vperm.slane %v332, %v339
      %v341 = vrot.slane %v328, 4
      %v342 = vsel %vm257, %v341, %v318
      %v343 = vrot.slane %v318, 4
      %v344 = vsel %vm257, %v328, %v343
      %v346 = vunpack.c.l.s4 1934713408
      %v347 = vunpack.c.0.s8 %v346
      %v348 = vperm.slane %v342, %v347
      %v350 = vunpack.c.l.s4 1934713408
      %v351 = vunpack.c.0.s8 %v350
      %v352 = vperm.slane %v344, %v351
      %v353 = vrot.slane %v336, 4
      %v354 = vsel %vm257, 0.0, %v353
      %v355 = vrot.slane %v340, 4
      %v356 = vsel %vm257, 0.0, %v355
      %v357 = vrot.slane %v348, 4
      %v358 = vsel %vm257, 0.0, %v357
      %v359 = vrot.slane %v352, 4
      %v360 = vsel %vm257, 0.0, %v359
      %v361 = vsel %vm257, %v303, %v284
      %v363 = vunpack.c.l.s4 1983009808
      %v364 = vunpack.c.0.s8 %v363
      %v365 = vperm.slane %v361, %v364
      %v366 = vrot.slane %v304, 4
      %v367 = vsel %vm257, %v366, %v302
      %v369 = vunpack.c.l.s4 1983009808
      %v370 = vunpack.c.0.s8 %v369
      %v371 = vperm.slane %v367, %v370
      %v372 = vsel %vm257, %v307, %v296
      %v374 = vunpack.c.l.s4 1983009808
      %v375 = vunpack.c.0.s8 %v374
      %v376 = vperm.slane %v372, %v375
      %v377 = vrot.slane %v308, 4
      %v378 = vsel %vm257, %v377, %v306
      %v380 = vunpack.c.l.s4 1983009808
      %v381 = vunpack.c.0.s8 %v380
      %v382 = vperm.slane %v378, %v381
      %v383 = vrot.slane %v371, 4
      %v384 = vsel %vm257, %v383, %v365
      %v386 = vunpack.c.l.s4 1934713408
      %v387 = vunpack.c.0.s8 %v386
      %v388 = vperm.slane %v384, %v387
      %v389 = vrot.slane %v382, 4
      %v390 = vsel %vm257, %v389, %v376
      %v392 = vunpack.c.l.s4 1934713408
      %v393 = vunpack.c.0.s8 %v392
      %v394 = vperm.slane %v390, %v393
      %v395 = vrot.slane %v394, 4
      %v396 = vsel %vm257, %v395, %v388
      %v397 = vrot.slane %v388, 4
      %v398 = vsel %vm257, %v394, %v397
      %v399 = vsel %vm257, %v355, %v336
      %v401 = vunpack.c.l.s4 1983009808
      %v402 = vunpack.c.0.s8 %v401
      %v403 = vperm.slane %v399, %v402
      %v404 = vrot.slane %v356, 4
      %v405 = vsel %vm257, %v404, %v354
      %v407 = vunpack.c.l.s4 1983009808
      %v408 = vunpack.c.0.s8 %v407
      %v409 = vperm.slane %v405, %v408
      %v410 = vsel %vm257, %v359, %v348
      %v412 = vunpack.c.l.s4 1983009808
      %v413 = vunpack.c.0.s8 %v412
      %v414 = vperm.slane %v410, %v413
      %v415 = vrot.slane %v360, 4
      %v416 = vsel %vm257, %v415, %v358
      %v418 = vunpack.c.l.s4 1983009808
      %v419 = vunpack.c.0.s8 %v418
      %v420 = vperm.slane %v416, %v419
      %v421 = vrot.slane %v409, 4
      %v422 = vsel %vm257, %v421, %v403
      %v424 = vunpack.c.l.s4 1934713408
      %v425 = vunpack.c.0.s8 %v424
      %v426 = vperm.slane %v422, %v425
      %v427 = vrot.slane %v420, 4
      %v428 = vsel %vm257, %v427, %v414
      %v430 = vunpack.c.l.s4 1934713408
      %v431 = vunpack.c.0.s8 %v430
      %v432 = vperm.slane %v428, %v431
      %v433 = vrot.slane %v432, 4
      %v434 = vsel %vm257, %v433, %v426
      %v435 = vrot.slane %v426, 4
      %v436 = vsel %vm257, %v432, %v435
      %439 = vrot.lane.b32.xlu0 %v243, 112
      %v440 = vpop.permute.xlu0 %439
      %441 = vrot.lane.b32.xlu0 %v246, 112
      %v442 = vpop.permute.xlu0 %441
      %v445 = vrot.slane %v243, 4
      %v446 = vsel %vm257, 0.0, %v445
      %v448 = vunpack.c.l.s4 1983009808
      %v449 = vunpack.c.0.s8 %v448
      %v450 = vperm.slane %v243, %v449
      %v452 = vunpack.c.l.s4 1983009808
      %v453 = vunpack.c.0.s8 %v452
      %v454 = vperm.slane %v446, %v453
      %v455 = vrot.slane %v440, 4
      %v456 = vsel %vm257, 0.0, %v455
      %v458 = vunpack.c.l.s4 1983009808
      %v459 = vunpack.c.0.s8 %v458
      %v460 = vperm.slane %v440, %v459
      %v462 = vunpack.c.l.s4 1983009808
      %v463 = vunpack.c.0.s8 %v462
      %v464 = vperm.slane %v456, %v463
      %v465 = vrot.slane %v460, 4
      %v466 = vsel %vm257, %v465, %v450
      %v467 = vrot.slane %v450, 4
      %v468 = vsel %vm257, %v460, %v467
      %v470 = vunpack.c.l.s4 1934713408
      %v471 = vunpack.c.0.s8 %v470
      %v472 = vperm.slane %v466, %v471
      %v474 = vunpack.c.l.s4 1934713408
      %v475 = vunpack.c.0.s8 %v474
      %v476 = vperm.slane %v468, %v475
      %v477 = vrot.slane %v464, 4
      %v478 = vsel %vm257, %v477, %v454
      %v479 = vrot.slane %v454, 4
      %v480 = vsel %vm257, %v464, %v479
      %v482 = vunpack.c.l.s4 1934713408
      %v483 = vunpack.c.0.s8 %v482
      %v484 = vperm.slane %v478, %v483
      %v486 = vunpack.c.l.s4 1934713408
      %v487 = vunpack.c.0.s8 %v486
      %v488 = vperm.slane %v480, %v487
      %v489 = vrot.slane %v472, 4
      %v490 = vsel %vm257, 0.0, %v489
      %v491 = vrot.slane %v476, 4
      %v492 = vsel %vm257, 0.0, %v491
      %v493 = vrot.slane %v484, 4
      %v494 = vsel %vm257, 0.0, %v493
      %v495 = vrot.slane %v488, 4
      %v496 = vsel %vm257, 0.0, %v495
      %v497 = vrot.slane %v246, 4
      %v498 = vsel %vm257, 0.0, %v497
      %v500 = vunpack.c.l.s4 1983009808
      %v501 = vunpack.c.0.s8 %v500
      %v502 = vperm.slane %v246, %v501
      %v504 = vunpack.c.l.s4 1983009808
      %v505 = vunpack.c.0.s8 %v504
      %v506 = vperm.slane %v498, %v505
      %v507 = vrot.slane %v442, 4
      %v508 = vsel %vm257, 0.0, %v507
      %v510 = vunpack.c.l.s4 1983009808
      %v511 = vunpack.c.0.s8 %v510
      %v512 = vperm.slane %v442, %v511
      %v514 = vunpack.c.l.s4 1983009808
      %v515 = vunpack.c.0.s8 %v514
      %v516 = vperm.slane %v508, %v515
      %v517 = vrot.slane %v512, 4
      %v518 = vsel %vm257, %v517, %v502
      %v519 = vrot.slane %v502, 4
      %v520 = vsel %vm257, %v512, %v519
      %v522 = vunpack.c.l.s4 1934713408
      %v523 = vunpack.c.0.s8 %v522
      %v524 = vperm.slane %v518, %v523
      %v526 = vunpack.c.l.s4 1934713408
      %v527 = vunpack.c.0.s8 %v526
      %v528 = vperm.slane %v520, %v527
      %v529 = vrot.slane %v516, 4
      %v530 = vsel %vm257, %v529, %v506
      %v531 = vrot.slane %v506, 4
      %v532 = vsel %vm257, %v516, %v531
      %v534 = vunpack.c.l.s4 1934713408
      %v535 = vunpack.c.0.s8 %v534
      %v536 = vperm.slane %v530, %v535
      %v538 = vunpack.c.l.s4 1934713408
      %v539 = vunpack.c.0.s8 %v538
      %v540 = vperm.slane %v532, %v539
      %v541 = vrot.slane %v524, 4
      %v542 = vsel %vm257, 0.0, %v541
      %v543 = vrot.slane %v528, 4
      %v544 = vsel %vm257, 0.0, %v543
      %v545 = vrot.slane %v536, 4
      %v546 = vsel %vm257, 0.0, %v545
      %v547 = vrot.slane %v540, 4
      %v548 = vsel %vm257, 0.0, %v547
      %v549 = vsel %vm257, %v491, %v472
      %v551 = vunpack.c.l.s4 1983009808
      %v552 = vunpack.c.0.s8 %v551
      %v553 = vperm.slane %v549, %v552
      %v554 = vrot.slane %v492, 4
      %v555 = vsel %vm257, %v554, %v490
      %v557 = vunpack.c.l.s4 1983009808
      %v558 = vunpack.c.0.s8 %v557
      %v559 = vperm.slane %v555, %v558
      %v560 = vsel %vm257, %v495, %v484
      %v562 = vunpack.c.l.s4 1983009808
      %v563 = vunpack.c.0.s8 %v562
      %v564 = vperm.slane %v560, %v563
      %v565 = vrot.slane %v496, 4
      %v566 = vsel %vm257, %v565, %v494
      %v568 = vunpack.c.l.s4 1983009808
      %v569 = vunpack.c.0.s8 %v568
      %v570 = vperm.slane %v566, %v569
      %v571 = vrot.slane %v559, 4
      %v572 = vsel %vm257, %v571, %v553
      %v574 = vunpack.c.l.s4 1934713408
      %v575 = vunpack.c.0.s8 %v574
      %v576 = vperm.slane %v572, %v575
      %v577 = vrot.slane %v570, 4
      %v578 = vsel %vm257, %v577, %v564
      %v580 = vunpack.c.l.s4 1934713408
      %v581 = vunpack.c.0.s8 %v580
      %v582 = vperm.slane %v578, %v581
      %v583 = vrot.slane %v582, 4
      %v584 = vsel %vm257, %v583, %v576
      %v585 = vrot.slane %v576, 4
      %v586 = vsel %vm257, %v582, %v585
      %v587 = vsel %vm257, %v543, %v524
      %v589 = vunpack.c.l.s4 1983009808
      %v590 = vunpack.c.0.s8 %v589
      %v591 = vperm.slane %v587, %v590
      %v592 = vrot.slane %v544, 4
      %v593 = vsel %vm257, %v592, %v542
      %v595 = vunpack.c.l.s4 1983009808
      %v596 = vunpack.c.0.s8 %v595
      %v597 = vperm.slane %v593, %v596
      %v598 = vsel %vm257, %v547, %v536
      %v600 = vunpack.c.l.s4 1983009808
      %v601 = vunpack.c.0.s8 %v600
      %v602 = vperm.slane %v598, %v601
      %v603 = vrot.slane %v548, 4
      %v604 = vsel %vm257, %v603, %v546
      %v606 = vunpack.c.l.s4 1983009808
      %v607 = vunpack.c.0.s8 %v606
      %v608 = vperm.slane %v604, %v607
      %v609 = vrot.slane %v597, 4
      %v610 = vsel %vm257, %v609, %v591
      %v612 = vunpack.c.l.s4 1934713408
      %v613 = vunpack.c.0.s8 %v612
      %v614 = vperm.slane %v610, %v613
      %v615 = vrot.slane %v608, 4
      %v616 = vsel %vm257, %v615, %v602
      %v618 = vunpack.c.l.s4 1934713408
      %v619 = vunpack.c.0.s8 %v618
      %v620 = vperm.slane %v616, %v619
      %v621 = vrot.slane %v620, 4
      %v622 = vsel %vm257, %v621, %v614
      %v623 = vrot.slane %v614, 4
      %v624 = vsel %vm257, %v620, %v623
      %vm625 = vcmask 130048
      %v627 = vsel %vm625, %v396, 0
      %629 = vmatpush.xpose.msra.mxu0 0.0
      %630 = vmatpush.xpose.msra.mxu0 0.0
      %631 = vmatpush.xpose.msra.mxu0 0.0
      %632 = vmatpush.xpose.msra.mxu0 0.0
      %633 = vmatpush.xpose.msra.mxu0 0.0
      %634 = vmatpush.xpose.msra.mxu0 0.0
      %635 = vmatpush.xpose.msra.mxu0 0.0
      %636 = vmatpush.xpose.msra.mxu0 0.0
      %637 = vmatpush.xpose.msra.mxu0 0.0
      %638 = vmatpush.xpose.msra.mxu0 0.0
      %639 = vmatpush.xpose.msra.mxu0 0.0
      %640 = vmatpush.xpose.msra.mxu0 0.0
      %641 = vmatpush.xpose.msra.mxu0 0.0
      %642 = vmatpush.xpose.msra.mxu0 0.0
      %643 = vmatpush.xpose.msra.mxu0 0.0
      %644 = vmatpush.xpose.msra.mxu0 %v627
      %645 = vmatmul.f32.gmra.mxu0 %v627
      %v646 = vpop.f32.mrf.mxu0
      %v647 = vadd.f32 0.0, %v646
      %648 = vdwg.mxu0
      %v650 = vsel %vm625, %v398, 0
      %652 = vmatpush.xpose.msra.mxu0 0.0
      %653 = vmatpush.xpose.msra.mxu0 0.0
      %654 = vmatpush.xpose.msra.mxu0 0.0
      %655 = vmatpush.xpose.msra.mxu0 0.0
      %656 = vmatpush.xpose.msra.mxu0 0.0
      %657 = vmatpush.xpose.msra.mxu0 0.0
      %658 = vmatpush.xpose.msra.mxu0 0.0
      %659 = vmatpush.xpose.msra.mxu0 0.0
      %660 = vmatpush.xpose.msra.mxu0 0.0
      %661 = vmatpush.xpose.msra.mxu0 0.0
      %662 = vmatpush.xpose.msra.mxu0 0.0
      %663 = vmatpush.xpose.msra.mxu0 0.0
      %664 = vmatpush.xpose.msra.mxu0 0.0
      %665 = vmatpush.xpose.msra.mxu0 0.0
      %666 = vmatpush.xpose.msra.mxu0 0.0
      %667 = vmatpush.xpose.msra.mxu0 %v650
      %668 = vmatmul.f32.gmra.mxu0 %v650
      %v669 = vpop.f32.mrf.mxu0
      %v670 = vadd.f32 0.0, %v669
      %671 = vdwg.mxu0
      %v673 = vsel %vm625, %v434, 0
      %675 = vmatpush.xpose.msra.mxu0 0.0
      %676 = vmatpush.xpose.msra.mxu0 0.0
      %677 = vmatpush.xpose.msra.mxu0 0.0
      %678 = vmatpush.xpose.msra.mxu0 0.0
      %679 = vmatpush.xpose.msra.mxu0 0.0
      %680 = vmatpush.xpose.msra.mxu0 0.0
      %681 = vmatpush.xpose.msra.mxu0 0.0
      %682 = vmatpush.xpose.msra.mxu0 0.0
      %683 = vmatpush.xpose.msra.mxu0 0.0
      %684 = vmatpush.xpose.msra.mxu0 0.0
      %685 = vmatpush.xpose.msra.mxu0 0.0
      %686 = vmatpush.xpose.msra.mxu0 0.0
      %687 = vmatpush.xpose.msra.mxu0 0.0
      %688 = vmatpush.xpose.msra.mxu0 0.0
      %689 = vmatpush.xpose.msra.mxu0 0.0
      %690 = vmatpush.xpose.msra.mxu0 %v673
      %691 = vmatmul.f32.gmra.mxu0 %v673
      %v692 = vpop.f32.mrf.mxu0
      %v693 = vadd.f32 0.0, %v692
      %694 = vdwg.mxu0
      %v696 = vsel %vm625, %v436, 0
      %698 = vmatpush.xpose.msra.mxu0 0.0
      %699 = vmatpush.xpose.msra.mxu0 0.0
      %700 = vmatpush.xpose.msra.mxu0 0.0
      %701 = vmatpush.xpose.msra.mxu0 0.0
      %702 = vmatpush.xpose.msra.mxu0 0.0
      %703 = vmatpush.xpose.msra.mxu0 0.0
      %704 = vmatpush.xpose.msra.mxu0 0.0
      %705 = vmatpush.xpose.msra.mxu0 0.0
      %706 = vmatpush.xpose.msra.mxu0 0.0
      %707 = vmatpush.xpose.msra.mxu0 0.0
      %708 = vmatpush.xpose.msra.mxu0 0.0
      %709 = vmatpush.xpose.msra.mxu0 0.0
      %710 = vmatpush.xpose.msra.mxu0 0.0
      %711 = vmatpush.xpose.msra.mxu0 0.0
      %712 = vmatpush.xpose.msra.mxu0 0.0
      %713 = vmatpush.xpose.msra.mxu0 %v696
      %714 = vmatmul.f32.gmra.mxu0 %v696
      %v715 = vpop.f32.mrf.mxu0
      %v716 = vadd.f32 0.0, %v715
      %717 = vdwg.mxu0
      %v718 = vmul.f32 %v647, 0.25
      %v719 = vmul.f32 %v670, 0.25
      %v720 = vmul.f32 %v693, 0.25
      %v721 = vmul.f32 %v716, 0.25
      %v722 = vadd.f32 %v718, %v158
      %v723 = vadd.f32 %v719, %v158
      %v724 = vadd.f32 %v720, %v158
      %v725 = vadd.f32 %v721, %v158
      %vm726 = vcmask 64512
      %v727 = vsel %vm726, %v722, -inf
      %728 = vmax.xlane.f32.xlu0 %v727
      %v729 = vpop.xlane.xlu0 %728
      %v730 = vsel %vm726, %v723, -inf
      %731 = vmax.xlane.f32.xlu0 %v730
      %v732 = vpop.xlane.xlu0 %731
      %v733 = vsel %vm726, %v724, -inf
      %734 = vmax.xlane.f32.xlu0 %v733
      %v735 = vpop.xlane.xlu0 %734
      %v736 = vsel %vm726, %v725, -inf
      %737 = vmax.xlane.f32.xlu0 %v736
      %v738 = vpop.xlane.xlu0 %737
      %v739 = vsub.f32 %v722, %v729
      %v740 = vsub.f32 %v723, %v732
      %v741 = vsub.f32 %v724, %v735
      %v742 = vsub.f32 %v725, %v738
      %v743 = vmul.f32 %v739, 1.442695
      %v744 = vpow.pop %v743
      %v745 = vmul.f32 %v740, 1.442695
      %v746 = vpow.pop %v745
      %v747 = vmul.f32 %v741, 1.442695
      %v748 = vpow.pop %v747
      %v749 = vmul.f32 %v742, 1.442695
      %v750 = vpow.pop %v749
      %v751 = vsel %vm726, %v744, 0.0
      %752 = vadd.xlane.f32.xlu0 %v751
      %v753 = vpop.xlane.xlu0 %752
      %v754 = vsel %vm726, %v746, 0.0
      %755 = vadd.xlane.f32.xlu0 %v754
      %v756 = vpop.xlane.xlu0 %755
      %v757 = vsel %vm726, %v748, 0.0
      %758 = vadd.xlane.f32.xlu0 %v757
      %v759 = vpop.xlane.xlu0 %758
      %v760 = vsel %vm726, %v750, 0.0
      %761 = vadd.xlane.f32.xlu0 %v760
      %v762 = vpop.xlane.xlu0 %761
      %v763 = vrcp.pop %v753
      %v764 = vrcp.pop %v756
      %v765 = vrcp.pop %v759
      %v766 = vrcp.pop %v762
      %v767 = vmul.f32 %v744, %v763
      %v768 = vmul.f32 %v746, %v764
      %v769 = vmul.f32 %v748, %v765
      %v770 = vmul.f32 %v750, %v766
      %772 = vset.pattern.permute.xlu0 0
      %773 = vperm.xlu0 %772, %v159
      %v774 = vpop.permute.xlu0 %773
      %v776 = vmul.f32 %v767, %v774
      %v777 = vmul.f32 %v768, %v774
      %v778 = vmul.f32 %v769, %v774
      %v779 = vmul.f32 %v770, %v774
      %v781 = vsel %vm726, %v776, 0
      %783 = vmatpush.msra.mxu0 0.0
      %784 = vmatpush.msra.mxu0 0.0
      %785 = vmatpush.msra.mxu0 0.0
      %786 = vmatpush.msra.mxu0 0.0
      %787 = vmatpush.msra.mxu0 0.0
      %788 = vmatpush.msra.mxu0 0.0
      %789 = vmatpush.msra.mxu0 0.0
      %790 = vmatpush.msra.mxu0 0.0
      %791 = vmatpush.msra.mxu0 0.0
      %792 = vmatpush.msra.mxu0 0.0
      %793 = vmatpush.msra.mxu0 0.0
      %794 = vmatpush.msra.mxu0 0.0
      %795 = vmatpush.msra.mxu0 0.0
      %796 = vmatpush.msra.mxu0 0.0
      %797 = vmatpush.msra.mxu0 0.0
      %798 = vmatpush.msra.mxu0 %v584
      %799 = vmatmul.f32.gmra.mxu0 %v781
      %v800 = vpop.f32.mrf.mxu0
      %v801 = vadd.f32 0.0, %v800
      %802 = vdwg.mxu0
      %v804 = vsel %vm726, %v777, 0
      %806 = vmatpush.msra.mxu0 0.0
      %807 = vmatpush.msra.mxu0 0.0
      %808 = vmatpush.msra.mxu0 0.0
      %809 = vmatpush.msra.mxu0 0.0
      %810 = vmatpush.msra.mxu0 0.0
      %811 = vmatpush.msra.mxu0 0.0
      %812 = vmatpush.msra.mxu0 0.0
      %813 = vmatpush.msra.mxu0 0.0
      %814 = vmatpush.msra.mxu0 0.0
      %815 = vmatpush.msra.mxu0 0.0
      %816 = vmatpush.msra.mxu0 0.0
      %817 = vmatpush.msra.mxu0 0.0
      %818 = vmatpush.msra.mxu0 0.0
      %819 = vmatpush.msra.mxu0 0.0
      %820 = vmatpush.msra.mxu0 0.0
      %821 = vmatpush.msra.mxu0 %v586
      %822 = vmatmul.f32.gmra.mxu0 %v804
      %v823 = vpop.f32.mrf.mxu0
      %v824 = vadd.f32 0.0, %v823
      %825 = vdwg.mxu0
      %v827 = vsel %vm726, %v778, 0
      %829 = vmatpush.msra.mxu0 0.0
      %830 = vmatpush.msra.mxu0 0.0
      %831 = vmatpush.msra.mxu0 0.0
      %832 = vmatpush.msra.mxu0 0.0
      %833 = vmatpush.msra.mxu0 0.0
      %834 = vmatpush.msra.mxu0 0.0
      %835 = vmatpush.msra.mxu0 0.0
      %836 = vmatpush.msra.mxu0 0.0
      %837 = vmatpush.msra.mxu0 0.0
      %838 = vmatpush.msra.mxu0 0.0
      %839 = vmatpush.msra.mxu0 0.0
      %840 = vmatpush.msra.mxu0 0.0
      %841 = vmatpush.msra.mxu0 0.0
      %842 = vmatpush.msra.mxu0 0.0
      %843 = vmatpush.msra.mxu0 0.0
      %844 = vmatpush.msra.mxu0 %v622
      %845 = vmatmul.f32.gmra.mxu0 %v827
      %v846 = vpop.f32.mrf.mxu0
      %v847 = vadd.f32 0.0, %v846
      %848 = vdwg.mxu0
      %v850 = vsel %vm726, %v779, 0
      %852 = vmatpush.msra.mxu0 0.0
      %853 = vmatpush.msra.mxu0 0.0
      %854 = vmatpush.msra.mxu0 0.0
      %855 = vmatpush.msra.mxu0 0.0
      %856 = vmatpush.msra.mxu0 0.0
      %857 = vmatpush.msra.mxu0 0.0
      %858 = vmatpush.msra.mxu0 0.0
      %859 = vmatpush.msra.mxu0 0.0
      %860 = vmatpush.msra.mxu0 0.0
      %861 = vmatpush.msra.mxu0 0.0
      %862 = vmatpush.msra.mxu0 0.0
      %863 = vmatpush.msra.mxu0 0.0
      %864 = vmatpush.msra.mxu0 0.0
      %865 = vmatpush.msra.mxu0 0.0
      %866 = vmatpush.msra.mxu0 0.0
      %867 = vmatpush.msra.mxu0 %v624
      %868 = vmatmul.f32.gmra.mxu0 %v850
      %v869 = vpop.f32.mrf.mxu0
      %v870 = vadd.f32 0.0, %v869
      %871 = vdwg.mxu0
      %v872 = vrot.slane %v801, 4
      %v873 = vsel %vm257, 0.0, %v872
      %v875 = vunpack.c.l.s4 1983009808
      %v876 = vunpack.c.0.s8 %v875
      %v877 = vperm.slane %v801, %v876
      %v879 = vunpack.c.l.s4 1983009808
      %v880 = vunpack.c.0.s8 %v879
      %v881 = vperm.slane %v873, %v880
      %v882 = vrot.slane %v824, 4
      %v883 = vsel %vm257, 0.0, %v882
      %v885 = vunpack.c.l.s4 1983009808
      %v886 = vunpack.c.0.s8 %v885
      %v887 = vperm.slane %v824, %v886
      %v889 = vunpack.c.l.s4 1983009808
      %v890 = vunpack.c.0.s8 %v889
      %v891 = vperm.slane %v883, %v890
      %v892 = vrot.slane %v887, 4
      %v893 = vsel %vm257, %v892, %v877
      %v894 = vrot.slane %v877, 4
      %v895 = vsel %vm257, %v887, %v894
      %v897 = vunpack.c.l.s4 1934713408
      %v898 = vunpack.c.0.s8 %v897
      %v899 = vperm.slane %v893, %v898
      %v901 = vunpack.c.l.s4 1934713408
      %v902 = vunpack.c.0.s8 %v901
      %v903 = vperm.slane %v895, %v902
      %v904 = vrot.slane %v891, 4
      %v905 = vsel %vm257, %v904, %v881
      %v906 = vrot.slane %v881, 4
      %v907 = vsel %vm257, %v891, %v906
      %v909 = vunpack.c.l.s4 1934713408
      %v910 = vunpack.c.0.s8 %v909
      %v911 = vperm.slane %v905, %v910
      %v913 = vunpack.c.l.s4 1934713408
      %v914 = vunpack.c.0.s8 %v913
      %v915 = vperm.slane %v907, %v914
      %v916 = vrot.slane %v899, 4
      %v917 = vsel %vm257, 0.0, %v916
      %v918 = vrot.slane %v903, 4
      %v919 = vsel %vm257, 0.0, %v918
      %v920 = vrot.slane %v911, 4
      %v921 = vsel %vm257, 0.0, %v920
      %v922 = vrot.slane %v915, 4
      %v923 = vsel %vm257, 0.0, %v922
      %v924 = vrot.slane %v847, 4
      %v925 = vsel %vm257, 0.0, %v924
      %v927 = vunpack.c.l.s4 1983009808
      %v928 = vunpack.c.0.s8 %v927
      %v929 = vperm.slane %v847, %v928
      %v931 = vunpack.c.l.s4 1983009808
      %v932 = vunpack.c.0.s8 %v931
      %v933 = vperm.slane %v925, %v932
      %v934 = vrot.slane %v870, 4
      %v935 = vsel %vm257, 0.0, %v934
      %v937 = vunpack.c.l.s4 1983009808
      %v938 = vunpack.c.0.s8 %v937
      %v939 = vperm.slane %v870, %v938
      %v941 = vunpack.c.l.s4 1983009808
      %v942 = vunpack.c.0.s8 %v941
      %v943 = vperm.slane %v935, %v942
      %v944 = vrot.slane %v939, 4
      %v945 = vsel %vm257, %v944, %v929
      %v946 = vrot.slane %v929, 4
      %v947 = vsel %vm257, %v939, %v946
      %v949 = vunpack.c.l.s4 1934713408
      %v950 = vunpack.c.0.s8 %v949
      %v951 = vperm.slane %v945, %v950
      %v953 = vunpack.c.l.s4 1934713408
      %v954 = vunpack.c.0.s8 %v953
      %v955 = vperm.slane %v947, %v954
      %v956 = vrot.slane %v943, 4
      %v957 = vsel %vm257, %v956, %v933
      %v958 = vrot.slane %v933, 4
      %v959 = vsel %vm257, %v943, %v958
      %v961 = vunpack.c.l.s4 1934713408
      %v962 = vunpack.c.0.s8 %v961
      %v963 = vperm.slane %v957, %v962
      %v965 = vunpack.c.l.s4 1934713408
      %v966 = vunpack.c.0.s8 %v965
      %v967 = vperm.slane %v959, %v966
      %v968 = vrot.slane %v951, 4
      %v969 = vsel %vm257, 0.0, %v968
      %v970 = vrot.slane %v955, 4
      %v971 = vsel %vm257, 0.0, %v970
      %v972 = vrot.slane %v963, 4
      %v973 = vsel %vm257, 0.0, %v972
      %v974 = vrot.slane %v967, 4
      %v975 = vsel %vm257, 0.0, %v974
      %v976 = vsel %vm257, %v918, %v899
      %v978 = vunpack.c.l.s4 1983009808
      %v979 = vunpack.c.0.s8 %v978
      %v980 = vperm.slane %v976, %v979
      %v981 = vrot.slane %v919, 4
      %v982 = vsel %vm257, %v981, %v917
      %v984 = vunpack.c.l.s4 1983009808
      %v985 = vunpack.c.0.s8 %v984
      %v986 = vperm.slane %v982, %v985
      %v987 = vsel %vm257, %v922, %v911
      %v989 = vunpack.c.l.s4 1983009808
      %v990 = vunpack.c.0.s8 %v989
      %v991 = vperm.slane %v987, %v990
      %v992 = vrot.slane %v923, 4
      %v993 = vsel %vm257, %v992, %v921
      %v995 = vunpack.c.l.s4 1983009808
      %v996 = vunpack.c.0.s8 %v995
      %v997 = vperm.slane %v993, %v996
      %v998 = vrot.slane %v986, 4
      %v999 = vsel %vm257, %v998, %v980
      %v1001 = vunpack.c.l.s4 1934713408
      %v1002 = vunpack.c.0.s8 %v1001
      %v1003 = vperm.slane %v999, %v1002
      %v1004 = vrot.slane %v997, 4
      %v1005 = vsel %vm257, %v1004, %v991
      %v1007 = vunpack.c.l.s4 1934713408
      %v1008 = vunpack.c.0.s8 %v1007
      %v1009 = vperm.slane %v1005, %v1008
      %v1010 = vrot.slane %v1009, 4
      %v1011 = vsel %vm257, %v1010, %v1003
      %v1012 = vrot.slane %v1003, 4
      %v1013 = vsel %vm257, %v1009, %v1012
      %v1014 = vsel %vm257, %v970, %v951
      %v1016 = vunpack.c.l.s4 1983009808
      %v1017 = vunpack.c.0.s8 %v1016
      %v1018 = vperm.slane %v1014, %v1017
      %v1019 = vrot.slane %v971, 4
      %v1020 = vsel %vm257, %v1019, %v969
      %v1022 = vunpack.c.l.s4 1983009808
      %v1023 = vunpack.c.0.s8 %v1022
      %v1024 = vperm.slane %v1020, %v1023
      %v1025 = vsel %vm257, %v974, %v963
      %v1027 = vunpack.c.l.s4 1983009808
      %v1028 = vunpack.c.0.s8 %v1027
      %v1029 = vperm.slane %v1025, %v1028
      %v1030 = vrot.slane %v975, 4
      %v1031 = vsel %vm257, %v1030, %v973
      %v1033 = vunpack.c.l.s4 1983009808
      %v1034 = vunpack.c.0.s8 %v1033
      %v1035 = vperm.slane %v1031, %v1034
      %v1036 = vrot.slane %v1024, 4
      %v1037 = vsel %vm257, %v1036, %v1018
      %v1039 = vunpack.c.l.s4 1934713408
      %v1040 = vunpack.c.0.s8 %v1039
      %v1041 = vperm.slane %v1037, %v1040
      %v1042 = vrot.slane %v1035, 4
      %v1043 = vsel %vm257, %v1042, %v1029
      %v1045 = vunpack.c.l.s4 1934713408
      %v1046 = vunpack.c.0.s8 %v1045
      %v1047 = vperm.slane %v1043, %v1046
      %v1048 = vrot.slane %v1047, 4
      %v1049 = vsel %vm257, %v1048, %v1041
      %v1050 = vrot.slane %v1041, 4
      %v1051 = vsel %vm257, %v1047, %v1050
      %1054 = vrot.lane.b32.xlu0 %v1013, 16
      %v1055 = vpop.permute.xlu0 %1054
      %1056 = vrot.lane.b32.xlu0 %v1051, 16
      %v1057 = vpop.permute.xlu0 %1056
      %v1060 = vsel %vm625, %v1011, %v1055
      %v1061 = vsel %vm625, %v1049, %v1057
      %s1062 = scalar_lea.vmem %s8, %s168
      %v1063 = vld [vmem:[%s1062] sm:$0xff]
      %v1064 = vld [vmem:[%s1062 + $0x8] sm:$0xff]
      %v1065 = vld [vmem:[%s1062 + $0x10] sm:$0xff]
      %v1066 = vld [vmem:[%s1062 + $0x18] sm:$0xff]
      %s1067 = scalar_lea.vmem %s9, %s161
      %v1068 = vld [vmem:[%s1067] sm:$0x1]
      %v1070 = vperm.slane %v1068, 0
      %v1073 = vsel %vm179, %v1060, 0
      %v1076 = vsel %vm179, %v1061, 0
      %1078 = vmatpush.msra.mxu0 0.0
      %1079 = vmatpush.msra.mxu0 0.0
      %1080 = vmatpush.msra.mxu0 0.0
      %1081 = vmatpush.msra.mxu0 0.0
      %1082 = vmatpush.msra.mxu0 0.0
      %1083 = vmatpush.msra.mxu0 0.0
      %1084 = vmatpush.msra.mxu0 0.0
      %1085 = vmatpush.msra.mxu0 0.0
      %1086 = vmatpush.msra.mxu0 0.0
      %1087 = vmatpush.msra.mxu0 0.0
      %1088 = vmatpush.msra.mxu0 0.0
      %1089 = vmatpush.msra.mxu0 0.0
      %1090 = vmatpush.msra.mxu0 %v1066
      %1091 = vmatpush.msra.mxu0 %v1065
      %1092 = vmatpush.msra.mxu0 %v1064
      %1093 = vmatpush.msra.mxu0 %v1063
      %1094 = vmatmul.f32.gmra.mxu0 %v1073
      %v1095 = vpop.f32.mrf.mxu0
      %v1096 = vadd.f32 %v1070, %v1095
      %1097 = vmatmul.f32.gmra.mxu0 %v1076
      %v1098 = vpop.f32.mrf.mxu0
      %v1099 = vadd.f32 %v1070, %v1098
      %1100 = vdwg.mxu0
      %v1101 = vadd.f32 %v166, %v1096
      %v1102 = vadd.f32 %v167, %v1099
      %s1103 = scalar_lea.vmem %s10, %s161
      %v1104 = vld [vmem:[%s1103] sm:$0x1]
      %s1105 = scalar_lea.vmem [#allocation8], %s161
      %v1106 = vld [vmem:[%s1105] sm:$0x1]
      %v1107 = vsel %vm179, %v1101, 0.0
      %1108 = vadd.xlane.f32.xlu0 %v1107
      %v1109 = vpop.xlane.xlu0 %1108
      %v1110 = vsel %vm179, %v1102, 0.0
      %1111 = vadd.xlane.f32.xlu0 %v1110
      %v1112 = vpop.xlane.xlu0 %1111
      %v1113 = vrcp.pop 32.0
      %v1114 = vmul.f32 32.0, %v1113
      %v1115 = vsub.f32 1.0, %v1114
      %v1116 = vmul.f32 %v1113, %v1115
      %v1117 = vadd.f32 %v1113, %v1116
      %vm1118 = vweird.f32 %v1113
      %v1119 = vsel %vm1118, %v1113, %v1117
      %v1120 = vmul.f32 %v1109, %v1119
      %v1121 = vmul.f32 %v1112, %v1119
      %v1122 = vsub.f32 %v1101, %v1120
      %v1123 = vsub.f32 %v1102, %v1121
      %v1124 = vmul.f32 %v1122, %v1122
      %v1125 = vmul.f32 %v1123, %v1123
      %v1126 = vsel %vm179, %v1124, 0.0
      %1127 = vadd.xlane.f32.xlu0 %v1126
      %v1128 = vpop.xlane.xlu0 %1127
      %v1129 = vsel %vm179, %v1125, 0.0
      %1130 = vadd.xlane.f32.xlu0 %v1129
      %v1131 = vpop.xlane.xlu0 %1130
      %v1132 = vmul.f32 %v1128, %v1119
      %v1133 = vmul.f32 %v1131, %v1119
      %v1134 = vadd.f32 %v1132, 1e-05
      %v1135 = vadd.f32 %v1133, 1e-05
      %v1136 = vrsqrt.pop %v1134
      %v1137 = vmul.f32 %v1136, %v1134
      %v1138 = vmul.f32 %v1137, %v1136
      %v1139 = vmul.f32 0.5, %v1138
      %v1140 = vsub.f32 1.5, %v1139
      %v1141 = vmul.f32 %v1136, %v1140
      %vm1142 = vweird.f32 %v1134
      %vm1143 = vweird.f32 %v1136
      %vm1144 = vmor %vm1142, %vm1143
      %v1145 = vsel %vm1144, %v1136, %v1141
      %v1146 = vrsqrt.pop %v1135
      %v1147 = vmul.f32 %v1146, %v1135
      %v1148 = vmul.f32 %v1147, %v1146
      %v1149 = vmul.f32 0.5, %v1148
      %v1150 = vsub.f32 1.5, %v1149
      %v1151 = vmul.f32 %v1146, %v1150
      %vm1152 = vweird.f32 %v1135
      %vm1153 = vweird.f32 %v1146
      %vm1154 = vmor %vm1152, %vm1153
      %v1155 = vsel %vm1154, %v1146, %v1151
      %v1156 = vmul.f32 %v1122, %v1145
      %v1157 = vmul.f32 %v1123, %v1155
      %v1159 = vperm.slane %v1104, 0
      %v1161 = vmul.f32 %v1156, %v1159
      %v1162 = vmul.f32 %v1157, %v1159
      %v1164 = vperm.slane %v1106, 0
      %v1166 = vadd.f32 %v1161, %v1164
      %v1167 = vadd.f32 %v1162, %v1164
      %s1168 = scalar_lea.vmem [#allocation10], %s168
      %v1169 = vld [vmem:[%s1168] sm:$0xff]
      %v1170 = vld [vmem:[%s1168 + $0x8] sm:$0xff]
      %v1171 = vld [vmem:[%s1168 + $0x10] sm:$0xff]
      %v1172 = vld [vmem:[%s1168 + $0x18] sm:$0xff]
      %s1173 = scalar_lea.vmem %s13, %s161
      %v1174 = vld [vmem:[%s1173] sm:$0x1]
      %v1176 = vperm.slane %v1174, 0
      %v1179 = vsel %vm179, %v1166, 0
      %v1182 = vsel %vm179, %v1167, 0
      %1184 = vmatpush.msra.mxu0 0.0
      %1185 = vmatpush.msra.mxu0 0.0
      %1186 = vmatpush.msra.mxu0 0.0
      %1187 = vmatpush.msra.mxu0 0.0
      %1188 = vmatpush.msra.mxu0 0.0
      %1189 = vmatpush.msra.mxu0 0.0
      %1190 = vmatpush.msra.mxu0 0.0
      %1191 = vmatpush.msra.mxu0 0.0
      %1192 = vmatpush.msra.mxu0 0.0
      %1193 = vmatpush.msra.mxu0 0.0
      %1194 = vmatpush.msra.mxu0 0.0
      %1195 = vmatpush.msra.mxu0 0.0
      %1196 = vmatpush.msra.mxu0 %v1172
      %1197 = vmatpush.msra.mxu0 %v1171
      %1198 = vmatpush.msra.mxu0 %v1170
      %1199 = vmatpush.msra.mxu0 %v1169
      %1200 = vmatmul.f32.gmra.mxu0 %v1179
      %v1201 = vpop.f32.mrf.mxu0
      %v1202 = vadd.f32 %v1176, %v1201
      %1203 = vmatmul.f32.gmra.mxu0 %v1182
      %v1204 = vpop.f32.mrf.mxu0
      %v1205 = vadd.f32 %v1176, %v1204
      %1206 = vdwg.mxu0
      %v1207 = vmax.f32 %v1202, 0.0
      %v1208 = vmax.f32 %v1205, 0.0
      %s1209 = smul.u32 %s161, 64
      %s1210 = scalar_lea.vmem %s14, %s1209
      %v1211 = vld [vmem:[%s1210] sm:$0xff]
      %v1212 = vld [vmem:[%s1210 + $0x8] sm:$0xff]
      %v1213 = vld [vmem:[%s1210 + $0x10] sm:$0xff]
      %v1214 = vld [vmem:[%s1210 + $0x18] sm:$0xff]
      %v1215 = vld [vmem:[%s1210 + $0x20] sm:$0xff]
      %v1216 = vld [vmem:[%s1210 + $0x28] sm:$0xff]
      %v1217 = vld [vmem:[%s1210 + $0x30] sm:$0xff]
      %v1218 = vld [vmem:[%s1210 + $0x38] sm:$0xff]
      %s1219 = scalar_lea.vmem %s15, %s161
      %v1220 = vld [vmem:[%s1219] sm:$0x1]
      %v1222 = vperm.slane %v1220, 0
      %vm1224 = vcmask 523264
      %v1226 = vsel %vm1224, %v1207, 0
      %v1229 = vsel %vm1224, %v1208, 0
      %1231 = vmatpush.msra.mxu0 0.0
      %1232 = vmatpush.msra.mxu0 0.0
      %1233 = vmatpush.msra.mxu0 0.0
      %1234 = vmatpush.msra.mxu0 0.0
      %1235 = vmatpush.msra.mxu0 0.0
      %1236 = vmatpush.msra.mxu0 0.0
      %1237 = vmatpush.msra.mxu0 0.0
      %1238 = vmatpush.msra.mxu0 0.0
      %1239 = vmatpush.msra.mxu0 %v1218
      %1240 = vmatpush.msra.mxu0 %v1217
      %1241 = vmatpush.msra.mxu0 %v1216
      %1242 = vmatpush.msra.mxu0 %v1215
      %1243 = vmatpush.msra.mxu0 %v1214
      %1244 = vmatpush.msra.mxu0 %v1213
      %1245 = vmatpush.msra.mxu0 %v1212
      %1246 = vmatpush.msra.mxu0 %v1211
      %1247 = vmatmul.f32.gmra.mxu0 %v1226
      %v1248 = vpop.f32.mrf.mxu0
      %v1249 = vadd.f32 %v1222, %v1248
      %1250 = vmatmul.f32.gmra.mxu0 %v1229
      %v1251 = vpop.f32.mrf.mxu0
      %v1252 = vadd.f32 %v1222, %v1251
      %1253 = vdwg.mxu0
      %v1254 = vadd.f32 %v1166, %v1249
      %v1255 = vadd.f32 %v1167, %v1252
      %s1256 = scalar_lea.vmem %s16, %s161
      %v1257 = vld [vmem:[%s1256] sm:$0x1]
      %s1258 = scalar_lea.vmem [#allocation11], %s161
      %v1259 = vld [vmem:[%s1258] sm:$0x1]
      %v1260 = vsel %vm179, %v1254, 0.0
      %1261 = vadd.xlane.f32.xlu0 %v1260
      %v1262 = vpop.xlane.xlu0 %1261
      %v1263 = vsel %vm179, %v1255, 0.0
      %1264 = vadd.xlane.f32.xlu0 %v1263
      %v1265 = vpop.xlane.xlu0 %1264
      %v1266 = vmul.f32 %v1262, %v1119
      %v1267 = vmul.f32 %v1265, %v1119
      %v1268 = vsub.f32 %v1254, %v1266
      %v1269 = vsub.f32 %v1255, %v1267
      %v1270 = vmul.f32 %v1268, %v1268
      %v1271 = vmul.f32 %v1269, %v1269
      %v1272 = vsel %vm179, %v1270, 0.0
      %1273 = vadd.xlane.f32.xlu0 %v1272
      %v1274 = vpop.xlane.xlu0 %1273
      %v1275 = vsel %vm179, %v1271, 0.0
      %1276 = vadd.xlane.f32.xlu0 %v1275
      %v1277 = vpop.xlane.xlu0 %1276
      %v1278 = vmul.f32 %v1274, %v1119
      %v1279 = vmul.f32 %v1277, %v1119
      %v1280 = vadd.f32 %v1278, 1e-05
      %v1281 = vadd.f32 %v1279, 1e-05
      %v1282 = vrsqrt.pop %v1280
      %v1283 = vmul.f32 %v1282, %v1280
      %v1284 = vmul.f32 %v1283, %v1282
      %v1285 = vmul.f32 0.5, %v1284
      %v1286 = vsub.f32 1.5, %v1285
      %v1287 = vmul.f32 %v1282, %v1286
      %vm1288 = vweird.f32 %v1280
      %vm1289 = vweird.f32 %v1282
      %vm1290 = vmor %vm1288, %vm1289
      %v1291 = vsel %vm1290, %v1282, %v1287
      %v1292 = vrsqrt.pop %v1281
      %v1293 = vmul.f32 %v1292, %v1281
      %v1294 = vmul.f32 %v1293, %v1292
      %v1295 = vmul.f32 0.5, %v1294
      %v1296 = vsub.f32 1.5, %v1295
      %v1297 = vmul.f32 %v1292, %v1296
      %vm1298 = vweird.f32 %v1281
      %vm1299 = vweird.f32 %v1292
      %vm1300 = vmor %vm1298, %vm1299
      %v1301 = vsel %vm1300, %v1292, %v1297
      %v1302 = vmul.f32 %v1268, %v1291
      %v1303 = vmul.f32 %v1269, %v1301
      %v1305 = vperm.slane %v1257, 0
      %v1307 = vmul.f32 %v1302, %v1305
      %v1308 = vmul.f32 %v1303, %v1305
      %v1310 = vperm.slane %v1259, 0
      %v1312 = vadd.f32 %v1307, %v1310
      %v1313 = vadd.f32 %v1308, %v1310
    $region102: #{tpu_custom_call.1} parent=1 // loop_footer
      %s165 = sadd.s32 1, %s161
    $region103: #{tpu_custom_call.1} parent=1 // loop_footer_branch
      %160 = sbr.rel target = $region99
    $region104: #{tpu_custom_call.1} parent=1 // loop_exit
      _
    %vm1314 = vcmask 261120
    %1315 = vst.msk [vmem:[#allocation13] sm:$0xff] %vm1314, %v166
    %1316 = vst.msk [vmem:[#allocation13 + $0x8] sm:$0xff] %vm1314, %v167
    // Predicated region
    $region105: #{tpu_custom_call.1} parent=1 // pred_check
      _
    $region106: #{tpu_custom_call.1} parent=1 // pred_check_branch
      %1318 = sbr.rel (0) target = $region108
    $region107: #{tpu_custom_call.1} parent=1 // pred_region
      %1320 = vsyncadd [#allocation4], 0
      %s1321 = sshll.u32 [#allocation13], 4
      %s1322 = int_to_ptr.vmem [resolvable:$true] %s1321
      %s1323 = sshll.u32 %s18, 4
      %s1324 = int_to_ptr.hbm [resolvable:$true] %s1323
      %1329 = dma.vmem_to_hbm [thread:$0]  %s1322, 256, %s1324, [#allocation4], 128, 128, 8
    $region108: #{tpu_custom_call.1} parent=1 // pred_fallthru
      _
    // Predicated region
    $region109: #{tpu_custom_call.1} parent=1 // pred_check
      _
    $region110: #{tpu_custom_call.1} parent=1 // pred_check_branch
      %1331 = sbr.rel (0) target = $region112
    $region111: #{tpu_custom_call.1} parent=1 // pred_region
      %1333 = dma.done [#allocation4], 256
    $region112: #{tpu_custom_call.1} parent=1 // pred_fallthru
      _
    %1334 = vsyncpa [#allocation3], 1
    %1335 = vsyncpa [#allocation6], 1
    %1336 = vsyncpa [#allocation9], 1
    %1337 = vsyncpa [#allocation12], 1
    %1338 = vsyncpa [#allocation4], 1

</llo_original>
